<compile_context>
chip_gen: v6e
topology: v6e:2x2x1
jax: 0.10.0
libtpu: 0.0.40
codegen_flags: <defaults>
</compile_context>

<pallas_src>
import numpy as np
import jax
import jax.numpy as jnp
from jax import lax
from jax.experimental import pallas as pl
from jax.experimental.pallas import tpu as pltpu

_VMEM_LIMIT_SMALL = 32 * 1024 * 1024
_VMEM_LIMIT_VIEW = 64 * 1024 * 1024
_SSIM_C1 = 0.01 ** 2
_SSIM_C2 = 0.03 ** 2


def _smem_spec():
    return pl.BlockSpec(memory_space=pltpu.MemorySpace.SMEM)


# -----------------------------------------------------------------------------
# Kernel 1: projection / inverse-warp -> bilinear gather indices + weights.
#           grid = (V-1, B)
# -----------------------------------------------------------------------------
def _projection_kernel(mb_ref, depth_ref, mask_ref, w00_ref, w01_ref, w10_ref,
                       w11_ref, i00_ref, i01_ref, i10_ref, i11_ref):
    h, w = depth_ref.shape
    row = pl.program_id(0) * pl.num_programs(1) + pl.program_id(1)
    base = row * 12
    # mb_ref holds row-major flattened 3x4 matrices [M | t] with
    # M = K_ref @ R_rel @ K_ref^-1 and t = K_ref @ t_rel.
    m = [mb_ref[base + i] for i in range(12)]
    xg = lax.broadcasted_iota(jnp.int32, (h, w), 1).astype(jnp.float32)
    yg = lax.broadcasted_iota(jnp.int32, (h, w), 0).astype(jnp.float32)
    d = depth_ref[...]
    q0 = m[0] * xg + m[1] * yg + m[2]
    q1 = m[4] * xg + m[5] * yg + m[6]
    q2 = m[8] * xg + m[9] * yg + m[10]
    p0 = q0 * d + m[3]
    p1 = q1 * d + m[7]
    p2 = q2 * d + m[11]
    inv = pl.reciprocal(p2 + 1e-10)   # exact: approx could flip floor() at integer bounds
    x = p0 * inv
    y = p1 * inv

    x0f = jnp.floor(x)
    y0f = jnp.floor(y)
    # TODO(synk): mask convention is x in [0, w-1), y in [0, h-1) (same as the
    #             previously accepted version); verify vs. torch inverse_warping.
    inb = ((x0f >= 0.0) & (x0f + 1.0 <= w - 1.0) &
           (y0f >= 0.0) & (y0f + 1.0 <= h - 1.0))
    mask_ref[...] = inb.astype(jnp.float32)

    x1f = x0f + 1.0
    y1f = y0f + 1.0
    x0c = jnp.clip(x0f, 0.0, w - 1.0)
    x1c = jnp.clip(x1f, 0.0, w - 1.0)
    y0c = jnp.clip(y0f, 0.0, h - 1.0)
    y1c = jnp.clip(y1f, 0.0, h - 1.0)
    wx0 = x1c - x
    wx1 = x - x0c
    wy0 = y1c - y
    wy1 = y - y0c
    w00_ref[...] = wx0 * wy0
    w01_ref[...] = wx0 * wy1
    w10_ref[...] = wx1 * wy0
    w11_ref[...] = wx1 * wy1

    x0i = x0c.astype(jnp.int32)
    x1i = x1c.astype(jnp.int32)
    y0i = y0c.astype(jnp.int32)
    y1i = y1c.astype(jnp.int32)
    i00_ref[...] = y0i * w + x0i
    i01_ref[...] = y1i * w + x0i
    i10_ref[...] = y0i * w + x1i
    i11_ref[...] = y1i * w + x1i


def _run_projection(mb_flat, depth, n_src):
    B, h, w = depth.shape
    f32 = jax.ShapeDtypeStruct((n_src, B, h, w), jnp.float32)
    i32 = jax.ShapeDtypeStruct((n_src, B, h, w), jnp.int32)
    out_spec = pl.BlockSpec((None, None, h, w), lambda v, b: (v, b, 0, 0))
    return pl.pallas_call(
        _projection_kernel,
        out_shape=(f32, f32, f32, f32, f32, i32, i32, i32, i32),
        grid=(n_src, B),
        in_specs=[_smem_spec(),
                  pl.BlockSpec((None, h, w), lambda v, b: (b, 0, 0))],
        out_specs=(out_spec,) * 9,
        compiler_params=pltpu.CompilerParams(
            dimension_semantics=("parallel", "parallel"),
            vmem_limit_bytes=_VMEM_LIMIT_SMALL),
    )(mb_flat, depth)


# -----------------------------------------------------------------------------
# Kernel 2: per-(batch, view) photometric + gradient + SSIM losses.
#           grid = (B, n_src): b outer (parallel), v inner (arbitrary) so the
#           ref image block stays resident across views and ref-only SSIM
#           stats can be hoisted into persistent scratch at v == 0.
# -----------------------------------------------------------------------------
def _smooth_l1(d):
    ad = jnp.abs(d)
    return jnp.where(ad < 1.0, 0.5 * d * d, ad - 0.5)


def _pad3(dst, z, h, w):
    """ReflectionPad2d(1): dst is a (C,h+2,w+2) VMEM ref, z a (C,h,w) value."""
    dst[:, 1:h + 1, 1:w + 1] = z
    dst[:, 0:1, 1:w + 1] = z[:, 1:2, :]
    dst[:, h + 1:h + 2, 1:w + 1] = z[:, h - 2:h - 1, :]
    dst[:, 1:h + 1, 0:1] = z[:, :, 1:2]
    dst[:, 1:h + 1, w + 1:w + 2] = z[:, :, w - 2:w - 1]
    dst[:, 0:1, 0:1] = z[:, 1:2, 1:2]
    dst[:, 0:1, w + 1:w + 2] = z[:, 1:2, w - 2:w - 1]
    dst[:, h + 1:h + 2, 0:1] = z[:, h - 2:h - 1, 1:2]
    dst[:, h + 1:h + 2, w + 1:w + 2] = z[:, h - 2:h - 1, w - 2:w - 1]


def _pad2(dst, z, h, w):
    """ReflectionPad2d(1): dst is a (h+2,w+2) VMEM ref, z a (h,w) value."""
    dst[1:h + 1, 1:w + 1] = z
    dst[0:1, 1:w + 1] = z[1:2, :]
    dst[h + 1:h + 2, 1:w + 1] = z[h - 2:h - 1, :]
    dst[1:h + 1, 0:1] = z[:, 1:2]
    dst[1:h + 1, w + 1:w + 2] = z[:, w - 2:w - 1]
    dst[0:1, 0:1] = z[1:2, 1:2]
    dst[0:1, w + 1:w + 2] = z[1:2, w - 2:w - 1]
    dst[h + 1:h + 2, 0:1] = z[h - 2:h - 1, 1:2]
    dst[h + 1:h + 2, w + 1:w + 2] = z[h - 2:h - 1, w - 2:w - 1]


def _make_view_loss_kernel(C, h, w):
    inv_photo = 1.0 / float(C * h * w)
    inv_dx = 1.0 / float(C * h * (w - 1))
    inv_dy = 1.0 / float(C * (h - 1) * w)
    k9 = 1.0 / 9.0

    def pool9_2d(buf):
        acc = None
        for di in range(3):
            for dj in range(3):
                t = buf[di:di + h, dj:dj + w]
                acc = t if acc is None else acc + t
        return acc * k9

    def ssim_ref_stats(pr):
        """mu_x, E[x^2] from the padded ref buffer (9-point load stencil)."""
        s1 = None
        s2 = None
        for di in range(3):
            for dj in range(3):
                t = pr[:, di:di + h, dj:dj + w]
                if s1 is None:
                    s1, s2 = t, t * t
                else:
                    s1 = s1 + t
                    s2 = s2 + t * t
        return s1 * k9, s2 * k9

    def ssim_src_stats(pr, pw):
        """mu_y, E[y^2], E[x*y] sharing one pass over the 9 windows."""
        s1 = None
        s2 = None
        s3 = None
        for di in range(3):
            for dj in range(3):
                tw = pw[:, di:di + h, dj:dj + w]
                tr = pr[:, di:di + h, dj:dj + w]
                if s1 is None:
                    s1, s2, s3 = tw, tw * tw, tr * tw
                else:
                    s1 = s1 + tw
                    s2 = s2 + tw * tw
                    s3 = s3 + tr * tw
        return s1 * k9, s2 * k9, s3 * k9

    def kernel(wrp_ref, ref_ref, mask_ref, rec_ref, ssim_ref,
               pref, pwrp, pmask, mux_scr, sigx_scr):
        v_id = pl.program_id(1)

        wrp = wrp_ref[...]             # (C, h, w) warped source view
        ref = ref_ref[...]             # (C, h, w) reference image
        m2 = mask_ref[...]             # (h, w)

        # ---- photometric + gradient smooth-L1 (means per (batch, view)) ----
        d = (wrp - ref) * m2[None, :, :]
        photo = jnp.sum(_smooth_l1(d))
        # shifted neighbors come straight from the input refs (no shifted
        # value-slice materialization, no scratch stores).
        dr = (wrp_ref[:, :, 1:w] - ref_ref[:, :, 1:w]) * mask_ref[:, 1:w][None, :, :]
        dl = (wrp_ref[:, :, 0:w - 1] - ref_ref[:, :, 0:w - 1]) * mask_ref[:, 0:w - 1][None, :, :]
        gx = jnp.sum(_smooth_l1(dr - dl))
        dd = (wrp_ref[:, 1:h, :] - ref_ref[:, 1:h, :]) * mask_ref[1:h, :][None, :, :]
        du = (wrp_ref[:, 0:h - 1, :] - ref_ref[:, 0:h - 1, :]) * mask_ref[0:h - 1, :][None, :, :]
        gy = jnp.sum(_smooth_l1(dd - du))
        rec = 0.5 * photo * inv_photo + 0.5 * (gx * inv_dx + gy * inv_dy)
        rec_ref[...] = jnp.full(rec_ref.shape, rec, jnp.float32)

        ssim_ref[...] = jnp.zeros(ssim_ref.shape, jnp.float32)

        # SSIM only for source views 1 and 2 (view < 3 in the reference).
        @pl.when(v_id < 2)
        def _():
            _pad3(pwrp, wrp, h, w)
            _pad2(pmask, m2, h, w)

            # ref-only statistics are view-independent: compute once per b.
            @pl.when(v_id == 0)
            def _():
                _pad3(pref, ref, h, w)
                mu, ex2 = ssim_ref_stats(pref)
                mux_scr[...] = mu
                sigx_scr[...] = ex2 - mu * mu

            mu_x = mux_scr[...]
            sig_x = sigx_scr[...]
            mu_y, ey2, exy = ssim_src_stats(pref, pwrp)
            sig_y = ey2 - mu_y * mu_y
            sig_xy = exy - mu_x * mu_y
            mask_pool = pool9_2d(pmask)            # (h, w), single channel

            ssim_n = (2.0 * mu_x * mu_y + _SSIM_C1) * (2.0 * sig_xy + _SSIM_C2)
            ssim_d = ((mu_x * mu_x + mu_y * mu_y + _SSIM_C1) *
                      (sig_x + sig_y + _SSIM_C2))
            ssim_map = mask_pool[None, :, :] * jnp.clip(
                (1.0 - ssim_n * pl.reciprocal(ssim_d, approx=True)) * 0.5,
                0.0, 1.0)
            ssim_ref[...] = jnp.full(ssim_ref.shape,
                                     jnp.sum(ssim_map) * inv_photo, jnp.float32)

    return kernel


def _run_view_loss(warped, ref_img, mask):
    n_src, B, C, h, w = warped.shape
    kernel = _make_view_loss_kernel(C, h, w)
    sds = jax.ShapeDtypeStruct((B, n_src, 8, 128), jnp.float32)
    scalar_spec = pl.BlockSpec((None, None, 8, 128), lambda b, v: (b, v, 0, 0))
    rec, ssim = pl.pallas_call(
        kernel,
        out_shape=(sds, sds),
        grid=(B, n_src),
        in_specs=[pl.BlockSpec((None, None, C, h, w),
                               lambda b, v: (v, b, 0, 0, 0)),
                  pl.BlockSpec((None, C, h, w), lambda b, v: (b, 0, 0, 0)),
                  pl.BlockSpec((None, None, h, w), lambda b, v: (v, b, 0, 0))],
        out_specs=(scalar_spec, scalar_spec),
        scratch_shapes=[pltpu.VMEM((C, h + 2, w + 2), jnp.float32),   # padded ref
                        pltpu.VMEM((C, h + 2, w + 2), jnp.float32),   # padded warped
                        pltpu.VMEM((h + 2, w + 2), jnp.float32),      # padded mask
                        pltpu.VMEM((C, h, w), jnp.float32),           # mu_x
                        pltpu.VMEM((C, h, w), jnp.float32)],          # sigma_x
        compiler_params=pltpu.CompilerParams(
            dimension_semantics=("parallel", "arbitrary"),
            vmem_limit_bytes=_VMEM_LIMIT_VIEW),
    )(warped, ref_img, mask)
    return rec[:, :, 0, 0], ssim[:, :, 0, 0]       # (B, V-1) each


# -----------------------------------------------------------------------------
# Kernel 3: reprojection volume top-1 (min over views) + masking + sum.
#           grid = (B,)
# -----------------------------------------------------------------------------
def _reproj_kernel(rec_ref, mask_ref, out_ref):
    n_src = mask_ref.shape[0]
    minv = None
    for v in range(n_src):
        rp = rec_ref[v] + 10000.0 * (1.0 - mask_ref[v])
        minv = rp if minv is None else jnp.minimum(minv, rp)
    keep = (minv < 10000.0).astype(jnp.float32)
    out_ref[...] = jnp.full(out_ref.shape, jnp.sum(minv * keep), jnp.float32)


def _run_reprojection(rec_v, mask):
    n_src, B, h, w = mask.shape
    out = pl.pallas_call(
        _reproj_kernel,
        out_shape=jax.ShapeDtypeStruct((B, 8, 128), jnp.float32),
        grid=(B,),
        in_specs=[_smem_spec(),
                  pl.BlockSpec((n_src, None, h, w), lambda b: (0, b, 0, 0))],
        out_specs=pl.BlockSpec((None, 8, 128), lambda b: (b, 0, 0)),
        compiler_params=pltpu.CompilerParams(
            dimension_semantics=("parallel",),
            vmem_limit_bytes=_VMEM_LIMIT_SMALL),
    )(rec_v, mask)
    return jnp.sum(out[:, 0, 0]) / float(B * h * w)


# -----------------------------------------------------------------------------
# JAX glue: camera algebra, nearest-neighbor downsample, gather + combine
# -----------------------------------------------------------------------------
def _compute_proj(ref_cam, view_cam):
    """ref_cam/view_cam: [B, 2, 4, 4] -> flattened [B, 12] projection (3x4)."""
    R_l = ref_cam[:, 0, 0:3, 0:3]
    t_l = ref_cam[:, 0, 0:3, 3:4]
    R_r = view_cam[:, 0, 0:3, 0:3]
    t_r = view_cam[:, 0, 0:3, 3:4]
    K_l = ref_cam[:, 1, 0:3, 0:3]
    K_l_inv = jnp.linalg.inv(K_l)
    R = R_r @ jnp.swapaxes(R_l, -1, -2)
    t = t_r - R @ t_l
    M = (K_l @ R) @ K_l_inv            # [B,3,3]
    bvec = K_l @ t                     # [B,3,1]
    mb = jnp.concatenate([M, bvec], axis=2)   # [B,3,4]
    return mb.reshape(mb.shape[0], 12).astype(jnp.float32)


def _downsample(img_nchw, stage_idx):
    # F.interpolate(mode='nearest', scale=0.25/0.5, recompute_scale_factor=True)
    if stage_idx == 0:
        return img_nchw[:, :, ::4, ::4]
    if stage_idx == 1:
        return img_nchw[:, :, ::2, ::2]
    return img_nchw


def _gather_warp(view_imgs, i00, i01, i10, i11, w00, w01, w10, w11):
    """view_imgs: [V-1,B,C,h,w]; indices/weights: [V-1,B,h,w] -> warped.

    TODO(synk): the data-dependent per-pixel 4-corner gather stays in plain
    JAX (jnp.take_along_axis); index/weight math lives in the Pallas
    projection kernel so only gathers + one fused combine remain here.
    """
    Vs, B, C, h, w = view_imgs.shape
    flat = view_imgs.reshape(Vs, B, C, h * w)

    def g(idx):
        idxf = jnp.broadcast_to(idx.reshape(Vs, B, 1, h * w), (Vs, B, C, h * w))
        return jnp.take_along_axis(flat, idxf, axis=3).reshape(Vs, B, C, h, w)

    return (w00[:, :, None] * g(i00) + w01[:, :, None] * g(i01) +
            w10[:, :, None] * g(i10) + w11[:, :, None] * g(i11))


# -----------------------------------------------------------------------------
# UnSupLoss_no_smooth / UnsupLossMultiStage_no_smooth forward
# -----------------------------------------------------------------------------
def unsup_loss_single_stage(imgs, cams, depth, stage_idx):
    """imgs: [B,V,C,H,W], cams: [B,V,2,4,4], depth: [B,h,w] -> (loss, rec, ssim)."""
    B, V, C, H, W = imgs.shape
    ref_img = _downsample(imgs[:, 0], stage_idx).astype(jnp.float32)  # [B,C,h,w]
    _, _, h, w = ref_img.shape
    assert depth.shape == (B, h, w)
    assert h >= 3 and w >= 3

    n_src = V - 1
    view_imgs = jnp.stack(
        [_downsample(imgs[:, v], stage_idx) for v in range(1, V)],
        axis=0).astype(jnp.float32)                              # [V-1,B,C,h,w]
    mb_flat = jnp.stack(
        [_compute_proj(cams[:, 0], cams[:, v]) for v in range(1, V)],
        axis=0).reshape(n_src * B * 12)                          # flat SMEM table

    (mask, w00, w01, w10, w11,
     i00, i01, i10, i11) = _run_projection(mb_flat, depth.astype(jnp.float32),
                                           n_src)
    warped = _gather_warp(view_imgs, i00, i01, i10, i11,
                          w00, w01, w10, w11)                    # [V-1,B,C,h,w]

    rec_bv, ssim_bv = _run_view_loss(warped, ref_img, mask)      # [B,V-1] each
    rec_v = jnp.mean(rec_bv, axis=0)                             # per-view scalar
    ssim_loss = jnp.sum(jnp.mean(ssim_bv, axis=0))               # views 1,2 only

    # compute_reconstr_loss(..., reduction='mean') is a scalar per view in the
    # reference, so the per-pixel top-1 only selects via the 1e4*(1-mask)
    # penalty — reproduced exactly here.
    reconstr_loss = _run_reprojection(rec_v, mask)
    unsup = 12.0 * reconstr_loss + 6.0 * ssim_loss
    return unsup, reconstr_loss, ssim_loss


def unsup_loss_multi_stage(inputs, imgs, cams, dlossw=None):
    total_loss = jnp.float32(0.0)
    scalar_outputs = {}
    for stage_key in sorted(k for k in inputs if 'stage' in k):
        stage_idx = int(stage_key.replace('stage', '')) - 1
        depth_est = inputs[stage_key]['depth']
        dl, rl, sl = unsup_loss_single_stage(imgs, cams[stage_key], depth_est,
                                             stage_idx)
        wgt = dlossw[stage_idx] if dlossw is not None else 1.0
        total_loss = total_loss + wgt * dl
        scalar_outputs['depth_loss_stage{}'.format(stage_idx + 1)] = dl
        scalar_outputs['reconstr_loss_stage{}'.format(stage_idx + 1)] = rl
        scalar_outputs['ssim_loss_stage{}'.format(stage_idx + 1)] = sl
    return total_loss, scalar_outputs


# -----------------------------------------------------------------------------
if __name__ == "__main__":
    key = jax.random.PRNGKey(0)
    B, V, C, H, W = 2, 3, 3, 16, 16
    k_img, k_d = jax.random.split(key)

    imgs = jax.random.uniform(k_img, (B, V, C, H, W), jnp.float32)

    def make_cams(h, w):
        cam = np.zeros((B, V, 2, 4, 4), np.float32)
        for b in range(B):
            for v in range(V):
                E = np.eye(4, dtype=np.float32)
                E[0, 3] = 0.08 * v + 0.01 * b    # small baseline translation
                E[1, 3] = 0.03 * v
                cam[b, v, 0] = E
                K = np.eye(4, dtype=np.float32)
                K[0, 0] = float(w)
                K[1, 1] = float(w)
                K[0, 2] = (w - 1) / 2.0
                K[1, 2] = (h - 1) / 2.0
                cam[b, v, 1] = K
        return jnp.asarray(cam)

    cams = {'stage1': make_cams(H // 4, W // 4),
            'stage2': make_cams(H // 2, W // 2),
            'stage3': make_cams(H, W)}

    dk = jax.random.split(k_d, 3)
    inputs = {
        'stage1': {'depth': 1.2 + 0.6 * jax.random.uniform(
            dk[0], (B, H // 4, W // 4), jnp.float32)},
        'stage2': {'depth': 1.2 + 0.6 * jax.random.uniform(
            dk[1], (B, H // 2, W // 2), jnp.float32)},
        'stage3': {'depth': 1.2 + 0.6 * jax.random.uniform(
            dk[2], (B, H, W), jnp.float32)},
    }

    total_loss, scalar_outputs = unsup_loss_multi_stage(
        inputs, imgs, cams, dlossw=[0.5, 1.0, 2.0])
    total_loss = jax.block_until_ready(total_loss)
    assert bool(jnp.isfinite(total_loss))
    print("KERNEL_OK")
</pallas_src>

<mosaic_0001>
module attributes {stable_mosaic.version = 11 : i64} {
  func.func @_projection_kernel(%arg0: i32, %arg1: i32, %arg2: memref<48xf32, #tpu.memory_space<smem>>, %arg3: memref<1x4x4xf32, #tpu.memory_space<vmem>>, %arg4: memref<1x1x4x4xf32, #tpu.memory_space<vmem>>, %arg5: memref<1x1x4x4xf32, #tpu.memory_space<vmem>>, %arg6: memref<1x1x4x4xf32, #tpu.memory_space<vmem>>, %arg7: memref<1x1x4x4xf32, #tpu.memory_space<vmem>>, %arg8: memref<1x1x4x4xf32, #tpu.memory_space<vmem>>, %arg9: memref<1x1x4x4xi32, #tpu.memory_space<vmem>>, %arg10: memref<1x1x4x4xi32, #tpu.memory_space<vmem>>, %arg11: memref<1x1x4x4xi32, #tpu.memory_space<vmem>>, %arg12: memref<1x1x4x4xi32, #tpu.memory_space<vmem>>) attributes {dimension_semantics = [#tpu.dimension_semantics<parallel>, #tpu.dimension_semantics<parallel>], iteration_bounds = array<i64: 2, 2>, scalar_prefetch = 0 : i64, scratch_operands = 0 : i64, tpu.core_type = #tpu.core_type<tc>, window_params = [{transform_indices = @transform_0, window_bounds = array<i64: 48>}, {transform_indices = @transform_1, window_bounds = array<i64: 1, 4, 4>}, {transform_indices = @transform_2, window_bounds = array<i64: 1, 1, 4, 4>}, {transform_indices = @transform_3, window_bounds = array<i64: 1, 1, 4, 4>}, {transform_indices = @transform_4, window_bounds = array<i64: 1, 1, 4, 4>}, {transform_indices = @transform_5, window_bounds = array<i64: 1, 1, 4, 4>}, {transform_indices = @transform_6, window_bounds = array<i64: 1, 1, 4, 4>}, {transform_indices = @transform_7, window_bounds = array<i64: 1, 1, 4, 4>}, {transform_indices = @transform_8, window_bounds = array<i64: 1, 1, 4, 4>}, {transform_indices = @transform_9, window_bounds = array<i64: 1, 1, 4, 4>}, {transform_indices = @transform_10, window_bounds = array<i64: 1, 1, 4, 4>}]} {
    %c2_i32 = arith.constant 2 : i32
    %0 = arith.muli %arg0, %c2_i32 : i32
    %1 = arith.addi %0, %arg1 : i32
    %c12_i32 = arith.constant 12 : i32
    %2 = arith.muli %1, %c12_i32 : i32
    %c0_i32 = arith.constant 0 : i32
    %3 = arith.addi %2, %c0_i32 : i32
    %4 = arith.index_cast %3 : i32 to index
    %5 = memref.load %arg2[%4] : memref<48xf32, #tpu.memory_space<smem>>
    %c1_i32 = arith.constant 1 : i32
    %6 = arith.addi %2, %c1_i32 : i32
    %7 = arith.index_cast %6 : i32 to index
    %8 = memref.load %arg2[%7] : memref<48xf32, #tpu.memory_space<smem>>
    %c2_i32_0 = arith.constant 2 : i32
    %9 = arith.addi %2, %c2_i32_0 : i32
    %10 = arith.index_cast %9 : i32 to index
    %11 = memref.load %arg2[%10] : memref<48xf32, #tpu.memory_space<smem>>
    %c3_i32 = arith.constant 3 : i32
    %12 = arith.addi %2, %c3_i32 : i32
    %13 = arith.index_cast %12 : i32 to index
    %14 = memref.load %arg2[%13] : memref<48xf32, #tpu.memory_space<smem>>
    %c4_i32 = arith.constant 4 : i32
    %15 = arith.addi %2, %c4_i32 : i32
    %16 = arith.index_cast %15 : i32 to index
    %17 = memref.load %arg2[%16] : memref<48xf32, #tpu.memory_space<smem>>
    %c5_i32 = arith.constant 5 : i32
    %18 = arith.addi %2, %c5_i32 : i32
    %19 = arith.index_cast %18 : i32 to index
    %20 = memref.load %arg2[%19] : memref<48xf32, #tpu.memory_space<smem>>
    %c6_i32 = arith.constant 6 : i32
    %21 = arith.addi %2, %c6_i32 : i32
    %22 = arith.index_cast %21 : i32 to index
    %23 = memref.load %arg2[%22] : memref<48xf32, #tpu.memory_space<smem>>
    %c7_i32 = arith.constant 7 : i32
    %24 = arith.addi %2, %c7_i32 : i32
    %25 = arith.index_cast %24 : i32 to index
    %26 = memref.load %arg2[%25] : memref<48xf32, #tpu.memory_space<smem>>
    %c8_i32 = arith.constant 8 : i32
    %27 = arith.addi %2, %c8_i32 : i32
    %28 = arith.index_cast %27 : i32 to index
    %29 = memref.load %arg2[%28] : memref<48xf32, #tpu.memory_space<smem>>
    %c9_i32 = arith.constant 9 : i32
    %30 = arith.addi %2, %c9_i32 : i32
    %31 = arith.index_cast %30 : i32 to index
    %32 = memref.load %arg2[%31] : memref<48xf32, #tpu.memory_space<smem>>
    %c10_i32 = arith.constant 10 : i32
    %33 = arith.addi %2, %c10_i32 : i32
    %34 = arith.index_cast %33 : i32 to index
    %35 = memref.load %arg2[%34] : memref<48xf32, #tpu.memory_space<smem>>
    %c11_i32 = arith.constant 11 : i32
    %36 = arith.addi %2, %c11_i32 : i32
    %37 = arith.index_cast %36 : i32 to index
    %38 = memref.load %arg2[%37] : memref<48xf32, #tpu.memory_space<smem>>
    %39 = tpu.iota {dimensions = array<i32: 1>} : vector<4x4xi32>
    %40 = arith.sitofp %39 : vector<4x4xi32> to vector<4x4xf32>
    %41 = tpu.iota {dimensions = array<i32: 0>} : vector<4x4xi32>
    %42 = arith.sitofp %41 : vector<4x4xi32> to vector<4x4xf32>
    %c0 = arith.constant 0 : index
    %c0_1 = arith.constant 0 : index
    %c0_2 = arith.constant 0 : index
    %43 = vector.load %arg3[%c0, %c0_1, %c0_2] : memref<1x4x4xf32, #tpu.memory_space<vmem>>, vector<1x4x4xf32>
    %44 = vector.shape_cast %43 : vector<1x4x4xf32> to vector<4x4xf32>
    %45 = vector.broadcast %5 : f32 to vector<4x4xf32>
    %46 = arith.mulf %45, %40 : vector<4x4xf32>
    %47 = vector.broadcast %8 : f32 to vector<4x4xf32>
    %48 = arith.mulf %47, %42 : vector<4x4xf32>
    %49 = arith.addf %46, %48 : vector<4x4xf32>
    %50 = vector.broadcast %11 : f32 to vector<4x4xf32>
    %51 = arith.addf %49, %50 : vector<4x4xf32>
    %52 = vector.broadcast %17 : f32 to vector<4x4xf32>
    %53 = arith.mulf %52, %40 : vector<4x4xf32>
    %54 = vector.broadcast %20 : f32 to vector<4x4xf32>
    %55 = arith.mulf %54, %42 : vector<4x4xf32>
    %56 = arith.addf %53, %55 : vector<4x4xf32>
    %57 = vector.broadcast %23 : f32 to vector<4x4xf32>
    %58 = arith.addf %56, %57 : vector<4x4xf32>
    %59 = vector.broadcast %29 : f32 to vector<4x4xf32>
    %60 = arith.mulf %59, %40 : vector<4x4xf32>
    %61 = vector.broadcast %32 : f32 to vector<4x4xf32>
    %62 = arith.mulf %61, %42 : vector<4x4xf32>
    %63 = arith.addf %60, %62 : vector<4x4xf32>
    %64 = vector.broadcast %35 : f32 to vector<4x4xf32>
    %65 = arith.addf %63, %64 : vector<4x4xf32>
    %66 = arith.mulf %51, %44 : vector<4x4xf32>
    %67 = vector.broadcast %14 : f32 to vector<4x4xf32>
    %68 = arith.addf %66, %67 : vector<4x4xf32>
    %69 = arith.mulf %58, %44 : vector<4x4xf32>
    %70 = vector.broadcast %26 : f32 to vector<4x4xf32>
    %71 = arith.addf %69, %70 : vector<4x4xf32>
    %72 = arith.mulf %65, %44 : vector<4x4xf32>
    %73 = vector.broadcast %38 : f32 to vector<4x4xf32>
    %74 = arith.addf %72, %73 : vector<4x4xf32>
    %cst = arith.constant 1.000000e-10 : f32
    %75 = vector.broadcast %cst : f32 to vector<4x4xf32>
    %76 = arith.addf %74, %75 : vector<4x4xf32>
    %77 = tpu.reciprocal %76 : vector<4x4xf32> -> vector<4x4xf32>
    %78 = arith.mulf %68, %77 : vector<4x4xf32>
    %79 = arith.mulf %71, %77 : vector<4x4xf32>
    %80 = math.floor %78 : vector<4x4xf32>
    %81 = math.floor %79 : vector<4x4xf32>
    %cst_3 = arith.constant 0.000000e+00 : f32
    %82 = vector.broadcast %cst_3 : f32 to vector<4x4xf32>
    %83 = arith.cmpf oge, %80, %82 : vector<4x4xf32>
    %cst_4 = arith.constant 1.000000e+00 : f32
    %84 = vector.broadcast %cst_4 : f32 to vector<4x4xf32>
    %85 = arith.addf %80, %84 : vector<4x4xf32>
    %cst_5 = arith.constant 3.000000e+00 : f32
    %86 = vector.broadcast %cst_5 : f32 to vector<4x4xf32>
    %87 = arith.cmpf ole, %85, %86 : vector<4x4xf32>
    %88 = arith.andi %83, %87 : vector<4x4xi1>
    %cst_6 = arith.constant 0.000000e+00 : f32
    %89 = vector.broadcast %cst_6 : f32 to vector<4x4xf32>
    %90 = arith.cmpf oge, %81, %89 : vector<4x4xf32>
    %91 = arith.andi %88, %90 : vector<4x4xi1>
    %cst_7 = arith.constant 1.000000e+00 : f32
    %92 = vector.broadcast %cst_7 : f32 to vector<4x4xf32>
    %93 = arith.addf %81, %92 : vector<4x4xf32>
    %cst_8 = arith.constant 3.000000e+00 : f32
    %94 = vector.broadcast %cst_8 : f32 to vector<4x4xf32>
    %95 = arith.cmpf ole, %93, %94 : vector<4x4xf32>
    %96 = arith.andi %91, %95 : vector<4x4xi1>
    %97 = arith.extui %96 : vector<4x4xi1> to vector<4x4xi32>
    %98 = arith.sitofp %97 : vector<4x4xi32> to vector<4x4xf32>
    %c0_9 = arith.constant 0 : index
    %c0_10 = arith.constant 0 : index
    %c0_11 = arith.constant 0 : index
    %c0_12 = arith.constant 0 : index
    %99 = vector.load %arg4[%c0_9, %c0_10, %c0_11, %c0_12] : memref<1x1x4x4xf32, #tpu.memory_space<vmem>>, vector<1x1x4x4xf32>
    %100 = vector.shape_cast %99 : vector<1x1x4x4xf32> to vector<4x4xf32>
    %101 = vector.shape_cast %98 : vector<4x4xf32> to vector<1x1x4x4xf32>
    tpu.vector_store %arg4[%c0_9, %c0_10, %c0_11, %c0_12], %101 {strides = array<i32>} : memref<1x1x4x4xf32, #tpu.memory_space<vmem>>, vector<1x1x4x4xf32>,
    %cst_13 = arith.constant 1.000000e+00 : f32
    %102 = vector.broadcast %cst_13 : f32 to vector<4x4xf32>
    %103 = arith.addf %80, %102 : vector<4x4xf32>
    %cst_14 = arith.constant 1.000000e+00 : f32
    %104 = vector.broadcast %cst_14 : f32 to vector<4x4xf32>
    %105 = arith.addf %81, %104 : vector<4x4xf32>
    %cst_15 = arith.constant 0.000000e+00 : f32
    %cst_16 = arith.constant 3.000000e+00 : f32
    %106 = vector.broadcast %cst_15 : f32 to vector<4x4xf32>
    %107 = arith.maximumf %106, %80 : vector<4x4xf32>
    %108 = vector.broadcast %cst_16 : f32 to vector<4x4xf32>
    %109 = arith.minimumf %108, %107 : vector<4x4xf32>
    %cst_17 = arith.constant 0.000000e+00 : f32
    %cst_18 = arith.constant 3.000000e+00 : f32
    %110 = vector.broadcast %cst_17 : f32 to vector<4x4xf32>
    %111 = arith.maximumf %110, %103 : vector<4x4xf32>
    %112 = vector.broadcast %cst_18 : f32 to vector<4x4xf32>
    %113 = arith.minimumf %112, %111 : vector<4x4xf32>
    %cst_19 = arith.constant 0.000000e+00 : f32
    %cst_20 = arith.constant 3.000000e+00 : f32
    %114 = vector.broadcast %cst_19 : f32 to vector<4x4xf32>
    %115 = arith.maximumf %114, %81 : vector<4x4xf32>
    %116 = vector.broadcast %cst_20 : f32 to vector<4x4xf32>
    %117 = arith.minimumf %116, %115 : vector<4x4xf32>
    %cst_21 = arith.constant 0.000000e+00 : f32
    %cst_22 = arith.constant 3.000000e+00 : f32
    %118 = vector.broadcast %cst_21 : f32 to vector<4x4xf32>
    %119 = arith.maximumf %118, %105 : vector<4x4xf32>
    %120 = vector.broadcast %cst_22 : f32 to vector<4x4xf32>
    %121 = arith.minimumf %120, %119 : vector<4x4xf32>
    %122 = arith.subf %113, %78 : vector<4x4xf32>
    %123 = arith.subf %78, %109 : vector<4x4xf32>
    %124 = arith.subf %121, %79 : vector<4x4xf32>
    %125 = arith.subf %79, %117 : vector<4x4xf32>
    %126 = arith.mulf %122, %124 : vector<4x4xf32>
    %c0_23 = arith.constant 0 : index
    %c0_24 = arith.constant 0 : index
    %c0_25 = arith.constant 0 : index
    %c0_26 = arith.constant 0 : index
    %127 = vector.load %arg5[%c0_23, %c0_24, %c0_25, %c0_26] : memref<1x1x4x4xf32, #tpu.memory_space<vmem>>, vector<1x1x4x4xf32>
    %128 = vector.shape_cast %127 : vector<1x1x4x4xf32> to vector<4x4xf32>
    %129 = vector.shape_cast %126 : vector<4x4xf32> to vector<1x1x4x4xf32>
    tpu.vector_store %arg5[%c0_23, %c0_24, %c0_25, %c0_26], %129 {strides = array<i32>} : memref<1x1x4x4xf32, #tpu.memory_space<vmem>>, vector<1x1x4x4xf32>,
    %130 = arith.mulf %122, %125 : vector<4x4xf32>
    %c0_27 = arith.constant 0 : index
    %c0_28 = arith.constant 0 : index
    %c0_29 = arith.constant 0 : index
    %c0_30 = arith.constant 0 : index
    %131 = vector.load %arg6[%c0_27, %c0_28, %c0_29, %c0_30] : memref<1x1x4x4xf32, #tpu.memory_space<vmem>>, vector<1x1x4x4xf32>
    %132 = vector.shape_cast %131 : vector<1x1x4x4xf32> to vector<4x4xf32>
    %133 = vector.shape_cast %130 : vector<4x4xf32> to vector<1x1x4x4xf32>
    tpu.vector_store %arg6[%c0_27, %c0_28, %c0_29, %c0_30], %133 {strides = array<i32>} : memref<1x1x4x4xf32, #tpu.memory_space<vmem>>, vector<1x1x4x4xf32>,
    %134 = arith.mulf %123, %124 : vector<4x4xf32>
    %c0_31 = arith.constant 0 : index
    %c0_32 = arith.constant 0 : index
    %c0_33 = arith.constant 0 : index
    %c0_34 = arith.constant 0 : index
    %135 = vector.load %arg7[%c0_31, %c0_32, %c0_33, %c0_34] : memref<1x1x4x4xf32, #tpu.memory_space<vmem>>, vector<1x1x4x4xf32>
    %136 = vector.shape_cast %135 : vector<1x1x4x4xf32> to vector<4x4xf32>
    %137 = vector.shape_cast %134 : vector<4x4xf32> to vector<1x1x4x4xf32>
    tpu.vector_store %arg7[%c0_31, %c0_32, %c0_33, %c0_34], %137 {strides = array<i32>} : memref<1x1x4x4xf32, #tpu.memory_space<vmem>>, vector<1x1x4x4xf32>,
    %138 = arith.mulf %123, %125 : vector<4x4xf32>
    %c0_35 = arith.constant 0 : index
    %c0_36 = arith.constant 0 : index
    %c0_37 = arith.constant 0 : index
    %c0_38 = arith.constant 0 : index
    %139 = vector.load %arg8[%c0_35, %c0_36, %c0_37, %c0_38] : memref<1x1x4x4xf32, #tpu.memory_space<vmem>>, vector<1x1x4x4xf32>
    %140 = vector.shape_cast %139 : vector<1x1x4x4xf32> to vector<4x4xf32>
    %141 = vector.shape_cast %138 : vector<4x4xf32> to vector<1x1x4x4xf32>
    tpu.vector_store %arg8[%c0_35, %c0_36, %c0_37, %c0_38], %141 {strides = array<i32>} : memref<1x1x4x4xf32, #tpu.memory_space<vmem>>, vector<1x1x4x4xf32>,
    %142 = arith.fptosi %109 : vector<4x4xf32> to vector<4x4xi32>
    %143 = arith.fptosi %113 : vector<4x4xf32> to vector<4x4xi32>
    %144 = arith.fptosi %117 : vector<4x4xf32> to vector<4x4xi32>
    %145 = arith.fptosi %121 : vector<4x4xf32> to vector<4x4xi32>
    %c4_i32_39 = arith.constant 4 : i32
    %146 = vector.broadcast %c4_i32_39 : i32 to vector<4x4xi32>
    %147 = arith.muli %144, %146 : vector<4x4xi32>
    %148 = arith.addi %147, %142 : vector<4x4xi32>
    %c0_40 = arith.constant 0 : index
    %c0_41 = arith.constant 0 : index
    %c0_42 = arith.constant 0 : index
    %c0_43 = arith.constant 0 : index
    %149 = vector.load %arg9[%c0_40, %c0_41, %c0_42, %c0_43] : memref<1x1x4x4xi32, #tpu.memory_space<vmem>>, vector<1x1x4x4xi32>
    %150 = vector.shape_cast %149 : vector<1x1x4x4xi32> to vector<4x4xi32>
    %151 = vector.shape_cast %148 : vector<4x4xi32> to vector<1x1x4x4xi32>
    tpu.vector_store %arg9[%c0_40, %c0_41, %c0_42, %c0_43], %151 {strides = array<i32>} : memref<1x1x4x4xi32, #tpu.memory_space<vmem>>, vector<1x1x4x4xi32>,
    %c4_i32_44 = arith.constant 4 : i32
    %152 = vector.broadcast %c4_i32_44 : i32 to vector<4x4xi32>
    %153 = arith.muli %145, %152 : vector<4x4xi32>
    %154 = arith.addi %153, %142 : vector<4x4xi32>
    %c0_45 = arith.constant 0 : index
    %c0_46 = arith.constant 0 : index
    %c0_47 = arith.constant 0 : index
    %c0_48 = arith.constant 0 : index
    %155 = vector.load %arg10[%c0_45, %c0_46, %c0_47, %c0_48] : memref<1x1x4x4xi32, #tpu.memory_space<vmem>>, vector<1x1x4x4xi32>
    %156 = vector.shape_cast %155 : vector<1x1x4x4xi32> to vector<4x4xi32>
    %157 = vector.shape_cast %154 : vector<4x4xi32> to vector<1x1x4x4xi32>
    tpu.vector_store %arg10[%c0_45, %c0_46, %c0_47, %c0_48], %157 {strides = array<i32>} : memref<1x1x4x4xi32, #tpu.memory_space<vmem>>, vector<1x1x4x4xi32>,
    %c4_i32_49 = arith.constant 4 : i32
    %158 = vector.broadcast %c4_i32_49 : i32 to vector<4x4xi32>
    %159 = arith.muli %144, %158 : vector<4x4xi32>
    %160 = arith.addi %159, %143 : vector<4x4xi32>
    %c0_50 = arith.constant 0 : index
    %c0_51 = arith.constant 0 : index
    %c0_52 = arith.constant 0 : index
    %c0_53 = arith.constant 0 : index
    %161 = vector.load %arg11[%c0_50, %c0_51, %c0_52, %c0_53] : memref<1x1x4x4xi32, #tpu.memory_space<vmem>>, vector<1x1x4x4xi32>
    %162 = vector.shape_cast %161 : vector<1x1x4x4xi32> to vector<4x4xi32>
    %163 = vector.shape_cast %160 : vector<4x4xi32> to vector<1x1x4x4xi32>
    tpu.vector_store %arg11[%c0_50, %c0_51, %c0_52, %c0_53], %163 {strides = array<i32>} : memref<1x1x4x4xi32, #tpu.memory_space<vmem>>, vector<1x1x4x4xi32>,
    %c4_i32_54 = arith.constant 4 : i32
    %164 = vector.broadcast %c4_i32_54 : i32 to vector<4x4xi32>
    %165 = arith.muli %145, %164 : vector<4x4xi32>
    %166 = arith.addi %165, %143 : vector<4x4xi32>
    %c0_55 = arith.constant 0 : index
    %c0_56 = arith.constant 0 : index
    %c0_57 = arith.constant 0 : index
    %c0_58 = arith.constant 0 : index
    %167 = vector.load %arg12[%c0_55, %c0_56, %c0_57, %c0_58] : memref<1x1x4x4xi32, #tpu.memory_space<vmem>>, vector<1x1x4x4xi32>
    %168 = vector.shape_cast %167 : vector<1x1x4x4xi32> to vector<4x4xi32>
    %169 = vector.shape_cast %166 : vector<4x4xi32> to vector<1x1x4x4xi32>
    tpu.vector_store %arg12[%c0_55, %c0_56, %c0_57, %c0_58], %169 {strides = array<i32>} : memref<1x1x4x4xi32, #tpu.memory_space<vmem>>, vector<1x1x4x4xi32>,
    return
  }
  func.func @transform_0(%arg0: i32, %arg1: i32) -> i32 {
    %c0_i32 = arith.constant 0 : i32
    %c0_i32_0 = arith.constant 0 : i32
    return %c0_i32 : i32
  }
  func.func @transform_1(%arg0: i32, %arg1: i32) -> (i32, i32, i32) {
    %c0_i32 = arith.constant 0 : i32
    %c0_i32_0 = arith.constant 0 : i32
    %c0_i32_1 = arith.constant 0 : i32
    return %arg1, %c0_i32, %c0_i32_0 : i32, i32, i32
  }
  func.func @transform_2(%arg0: i32, %arg1: i32) -> (i32, i32, i32, i32) {
    %c0_i32 = arith.constant 0 : i32
    %c0_i32_0 = arith.constant 0 : i32
    %c0_i32_1 = arith.constant 0 : i32
    return %arg0, %arg1, %c0_i32, %c0_i32_0 : i32, i32, i32, i32
  }
  func.func @transform_3(%arg0: i32, %arg1: i32) -> (i32, i32, i32, i32) {
    %c0_i32 = arith.constant 0 : i32
    %c0_i32_0 = arith.constant 0 : i32
    %c0_i32_1 = arith.constant 0 : i32
    return %arg0, %arg1, %c0_i32, %c0_i32_0 : i32, i32, i32, i32
  }
  func.func @transform_4(%arg0: i32, %arg1: i32) -> (i32, i32, i32, i32) {
    %c0_i32 = arith.constant 0 : i32
    %c0_i32_0 = arith.constant 0 : i32
    %c0_i32_1 = arith.constant 0 : i32
    return %arg0, %arg1, %c0_i32, %c0_i32_0 : i32, i32, i32, i32
  }
  func.func @transform_5(%arg0: i32, %arg1: i32) -> (i32, i32, i32, i32) {
    %c0_i32 = arith.constant 0 : i32
    %c0_i32_0 = arith.constant 0 : i32
    %c0_i32_1 = arith.constant 0 : i32
    return %arg0, %arg1, %c0_i32, %c0_i32_0 : i32, i32, i32, i32
  }
  func.func @transform_6(%arg0: i32, %arg1: i32) -> (i32, i32, i32, i32) {
    %c0_i32 = arith.constant 0 : i32
    %c0_i32_0 = arith.constant 0 : i32
    %c0_i32_1 = arith.constant 0 : i32
    return %arg0, %arg1, %c0_i32, %c0_i32_0 : i32, i32, i32, i32
  }
  func.func @transform_7(%arg0: i32, %arg1: i32) -> (i32, i32, i32, i32) {
    %c0_i32 = arith.constant 0 : i32
    %c0_i32_0 = arith.constant 0 : i32
    %c0_i32_1 = arith.constant 0 : i32
    return %arg0, %arg1, %c0_i32, %c0_i32_0 : i32, i32, i32, i32
  }
  func.func @transform_8(%arg0: i32, %arg1: i32) -> (i32, i32, i32, i32) {
    %c0_i32 = arith.constant 0 : i32
    %c0_i32_0 = arith.constant 0 : i32
    %c0_i32_1 = arith.constant 0 : i32
    return %arg0, %arg1, %c0_i32, %c0_i32_0 : i32, i32, i32, i32
  }
  func.func @transform_9(%arg0: i32, %arg1: i32) -> (i32, i32, i32, i32) {
    %c0_i32 = arith.constant 0 : i32
    %c0_i32_0 = arith.constant 0 : i32
    %c0_i32_1 = arith.constant 0 : i32
    return %arg0, %arg1, %c0_i32, %c0_i32_0 : i32, i32, i32, i32
  }
  func.func @transform_10(%arg0: i32, %arg1: i32) -> (i32, i32, i32, i32) {
    %c0_i32 = arith.constant 0 : i32
    %c0_i32_0 = arith.constant 0 : i32
    %c0_i32_1 = arith.constant 0 : i32
    return %arg0, %arg1, %c0_i32, %c0_i32_0 : i32, i32, i32, i32
  }
}

</mosaic_0001>

<llo_original>
// kernel: tpu_custom_call.1
$region0: #{tpu_custom_call.1}
  #allocation0 [shape = 'u32[]', space=smem, size = 0x4, offset = 0x4, fixed_abs, tag = 'smem constant byte address 0x4 - core index']
  #allocation1 [shape = 'u32[144,128]{1,0:T(1,128)}', space=vmem, size = 0x12000, scoped, tag = 'internal scratch']
  %s0 = inlined_call_operand.hbm [shape: f32[48], index: 0, kind: input, shape index: {}]
  %s1 = inlined_call_operand.hbm [shape: f32[2,4,4], index: 1, kind: input, shape index: {}]
  %s2 = inlined_call_operand.hbm [shape: f32[2,2,4,4], index: 2, kind: output, shape index: {0}]
  %s3 = inlined_call_operand.hbm [shape: f32[2,2,4,4], index: 3, kind: output, shape index: {1}]
  %s4 = inlined_call_operand.hbm [shape: f32[2,2,4,4], index: 4, kind: output, shape index: {2}]
  %s5 = inlined_call_operand.hbm [shape: f32[2,2,4,4], index: 5, kind: output, shape index: {3}]
  %s6 = inlined_call_operand.hbm [shape: f32[2,2,4,4], index: 6, kind: output, shape index: {4}]
  %s7 = inlined_call_operand.hbm [shape: s32[2,2,4,4], index: 7, kind: output, shape index: {5}]
  %s8 = inlined_call_operand.hbm [shape: s32[2,2,4,4], index: 8, kind: output, shape index: {6}]
  %s9 = inlined_call_operand.hbm [shape: s32[2,2,4,4], index: 9, kind: output, shape index: {7}]
  %s10 = inlined_call_operand.hbm [shape: s32[2,2,4,4], index: 10, kind: output, shape index: {8}]
  %11 = xla_tuple %s2, %s3, %s4, %s5, %s6, %s7, %s8, %s9, %s10
  %s12 = sld [smem:[#allocation0]]
  $region113: #{tpu_custom_call.1} parent=0
    _
  %s14 = ssub.s32 1, %s12
  %s15 = scalar_select 0, %s14, %s12
  $region1: #{tpu_custom_call.1} parent=0
    #allocation2 [shape = 'u8[512]{0}', space=smem, size = 0x200, scoped, tag = 'input window, operand 0, single buffered']
    #allocation3 [shape = 's32[2]{0}', space=sflag, size = 0x8, scoped, tag = 'scoped memory for tpu_custom_call.1']
    #allocation4 [shape = 's32[2]{0}', space=sflag, size = 0x8, scoped, tag = 'scoped memory for tpu_custom_call.1']
    #allocation5 [shape = 's32[2]{0}', space=sflag, size = 0x8, scoped, tag = 'scoped memory for tpu_custom_call.1']
    #allocation6 [shape = 'u8[4096]{0}', space=vmem, size = 0x1000, scoped, tag = 'input window, operand 1']
    #allocation7 [shape = 'u8[4096]{0}', space=vmem, size = 0x1000, scoped, tag = 'output window, operand 0']
    #allocation8 [shape = 'u8[4096]{0}', space=vmem, size = 0x1000, scoped, tag = 'output window, operand 1']
    #allocation9 [shape = 's32[2]{0}', space=sflag, size = 0x8, scoped, tag = 'scoped memory for tpu_custom_call.1']
    #allocation10 [shape = 'u8[4096]{0}', space=vmem, size = 0x1000, scoped, tag = 'output window, operand 2']
    #allocation11 [shape = 'u8[4096]{0}', space=vmem, size = 0x1000, scoped, tag = 'output window, operand 3']
    #allocation12 [shape = 's32[2]{0}', space=sflag, size = 0x8, scoped, tag = 'scoped memory for tpu_custom_call.1']
    #allocation13 [shape = 'u8[4096]{0}', space=vmem, size = 0x1000, scoped, tag = 'output window, operand 4']
    #allocation14 [shape = 'u8[4096]{0}', space=vmem, size = 0x1000, scoped, tag = 'output window, operand 5']
    #allocation15 [shape = 's32[2]{0}', space=sflag, size = 0x8, scoped, tag = 'scoped memory for tpu_custom_call.1']
    #allocation16 [shape = 'u8[4096]{0}', space=vmem, size = 0x1000, scoped, tag = 'output window, operand 6']
    #allocation17 [shape = 'u8[4096]{0}', space=vmem, size = 0x1000, scoped, tag = 'output window, operand 7']
    #allocation18 [shape = 's32[2]{0}', space=sflag, size = 0x8, scoped, tag = 'scoped memory for tpu_custom_call.1']
    #allocation19 [shape = 'u8[4096]{0}', space=vmem, size = 0x1000, scoped, tag = 'output window, operand 8']
    %16 = vsyncpa [#allocation5], 0
    %17 = vsyncpa [#allocation3], 0
    %s18 = scalar_lea.sflag [#allocation3], 1
    %19 = vsyncpa %s18, 0
    %20 = vsyncpa [#allocation4], 0
    %s21 = scalar_lea.sflag [#allocation4], 1
    %22 = vsyncpa %s21, 0
    %23 = vsyncpa [#allocation9], 0
    %s24 = scalar_lea.sflag [#allocation9], 1
    %25 = vsyncpa %s24, 0
    %26 = vsyncpa [#allocation12], 0
    %s27 = scalar_lea.sflag [#allocation12], 1
    %28 = vsyncpa %s27, 0
    %29 = vsyncpa [#allocation15], 0
    %s30 = scalar_lea.sflag [#allocation15], 1
    %31 = vsyncpa %s30, 0
    %32 = vsyncpa [#allocation18], 0
    %s33 = scalar_lea.sflag [#allocation18], 1
    %34 = vsyncpa %s33, 0
    loop: start=0, step=1, limit=6
    $region2: #{tpu_custom_call.1} parent=1 // loop_pre_header
      _
    $region3: #{tpu_custom_call.1} parent=1 // loop_header
      %s36 = sphi 0, %s40
      %p37 = scmp.ge.s32.totalorder %s36, 6
      %s43 = sphi 0, %s55
      %s44 = sphi 0, %s51
      %s45 = sphi 0, %s43
      %s46 = sphi 0, %s44
      %s47 = sphi 0, %s45
      %s48 = sphi 0, %s46
      %s56 = sphi 0, %s56
      %s58 = sphi 0, %s56
      %s59 = sphi 0, %s58
      %s73 = sphi 0, %s59
      %s79 = sphi 0, %s81
      %s82 = sphi 0, %s79
      %s83 = sphi 0, %s82
      %s99 = sphi 0, %s83
      %s107 = sphi 0, %s109
      %s110 = sphi 0, %s107
      %s111 = sphi 0, %s110
      %s127 = sphi 0, %s111
      %s135 = sphi 0, %s137
      %s138 = sphi 0, %s135
      %s139 = sphi 0, %s138
      %s155 = sphi 0, %s139
      %s163 = sphi 0, %s165
      %s166 = sphi 0, %s163
      %s167 = sphi 0, %s166
      %s183 = sphi 0, %s167
      %s191 = sphi 0, %s193
      %s194 = sphi 0, %s191
      %s195 = sphi 0, %s194
      %s211 = sphi 0, %s195
      %s219 = sphi 0, %s221
      %s222 = sphi 0, %s219
      %s223 = sphi 0, %s222
      %s239 = sphi 0, %s223
      %s247 = sphi 0, %s249
      %s250 = sphi 0, %s247
      %s251 = sphi 0, %s250
      %s267 = sphi 0, %s251
      %s275 = sphi 0, %s277
      %s278 = sphi 0, %s275
      %s279 = sphi 0, %s278
      %s295 = sphi 0, %s279
      %s303 = sphi 0, %s305
      %s306 = sphi 0, %s303
      %s307 = sphi 0, %s306
      %s323 = sphi 0, %s307
      %s331 = sphi 0, %s333
      %s334 = sphi 0, %s331
      %s335 = sphi 0, %s334
      %s351 = sphi 0, %s335
    $region4: #{tpu_custom_call.1} parent=1 // loop_header_branch
      %39 = sbr.rel (%p37) target = $region8
    $region5: #{tpu_custom_call.1} parent=1 // loop_body
      %s41 = ssub.s32 %s36, 1
      %s42 = ssub.s32 %s36, 2
      %s49 = sadd.s32 1, %s44
      %p50 = scmp.ge.s32.totalorder %s49, 2
      %s51 = scalar_select %p50, 0, %s49
      %s52 = sadd.s32 1, %s43
      %s53 = scalar_select %p50, %s52, %s43
      %p54 = scmp.ge.s32.totalorder %s53, 2
      %s55 = scalar_select %p54, 0, %s53
      %s57 = sadd.s32 %s56, 1
      %p60 = scmp.eq.s32.totalorder %s36, 3
      %p61 = scmp.ne.s32.totalorder %s56, %s58
      %p62 = scmp.eq.s32.totalorder %s36, 0
      %p63 = por %p61, %p62
      %p64 = scmp.ne.s32.totalorder %s56, %s58
      %p65 = scmp.eq.s32.totalorder %s41, 3
      %p66 = por %p64, %p65
      %p67 = scmp.ne.s32.totalorder %s58, %s59
      %p68 = scmp.eq.s32.totalorder %s41, 0
      %p69 = por %p67, %p68
      %p70 = scmp.ne.s32.totalorder %s58, %s59
      %p71 = scmp.eq.s32.totalorder %s42, 3
      %p72 = por %p70, %p71
      %p74 = scmp.ne.s32.totalorder %s59, %s73
      %p75 = scmp.eq.s32.totalorder %s42, 0
      %p76 = por %p74, %p75
      %s77 = ssub.s32 %s44, %s51
      %p78 = scmp.eq.s32.totalorder %s77, 0
      %s80 = sadd.s32 %s79, 1
      %s81 = scalar_select %p78, %s79, %s80
      %p84 = pneg %p78
      %p85 = scmp.eq.s32.totalorder %s36, 3
      %p86 = por %p84, %p85
      %p87 = scmp.ne.s32.totalorder %s79, %s82
      %p88 = scmp.eq.s32.totalorder %s36, 0
      %p89 = por %p87, %p88
      %p90 = scmp.ne.s32.totalorder %s79, %s82
      %p91 = scmp.eq.s32.totalorder %s41, 3
      %p92 = por %p90, %p91
      %p93 = scmp.ne.s32.totalorder %s82, %s83
      %p94 = scmp.eq.s32.totalorder %s41, 0
      %p95 = por %p93, %p94
      %p96 = scmp.ne.s32.totalorder %s82, %s83
      %p97 = scmp.eq.s32.totalorder %s42, 3
      %p98 = por %p96, %p97
      %p100 = scmp.ne.s32.totalorder %s83, %s99
      %p101 = scmp.eq.s32.totalorder %s42, 0
      %p102 = por %p100, %p101
      %s103 = ssub.s32 %s43, %s55
      %s104 = ssub.s32 %s44, %s51
      %s105 = sor.u32 %s103, %s104
      %p106 = scmp.eq.s32.totalorder %s105, 0
      %s108 = sadd.s32 %s107, 1
      %s109 = scalar_select %p106, %s107, %s108
      %p112 = pneg %p106
      %p113 = scmp.eq.s32.totalorder %s36, 3
      %p114 = por %p112, %p113
      %p115 = scmp.ne.s32.totalorder %s107, %s110
      %p116 = scmp.eq.s32.totalorder %s36, 0
      %p117 = por %p115, %p116
      %p118 = scmp.ne.s32.totalorder %s107, %s110
      %p119 = scmp.eq.s32.totalorder %s41, 3
      %p120 = por %p118, %p119
      %p121 = scmp.ne.s32.totalorder %s110, %s111
      %p122 = scmp.eq.s32.totalorder %s41, 0
      %p123 = por %p121, %p122
      %p124 = scmp.ne.s32.totalorder %s110, %s111
      %p125 = scmp.eq.s32.totalorder %s42, 3
      %p126 = por %p124, %p125
      %p128 = scmp.ne.s32.totalorder %s111, %s127
      %p129 = scmp.eq.s32.totalorder %s42, 0
      %p130 = por %p128, %p129
      %s131 = ssub.s32 %s43, %s55
      %s132 = ssub.s32 %s44, %s51
      %s133 = sor.u32 %s131, %s132
      %p134 = scmp.eq.s32.totalorder %s133, 0
      %s136 = sadd.s32 %s135, 1
      %s137 = scalar_select %p134, %s135, %s136
      %p140 = pneg %p134
      %p141 = scmp.eq.s32.totalorder %s36, 3
      %p142 = por %p140, %p141
      %p143 = scmp.ne.s32.totalorder %s135, %s138
      %p144 = scmp.eq.s32.totalorder %s36, 0
      %p145 = por %p143, %p144
      %p146 = scmp.ne.s32.totalorder %s135, %s138
      %p147 = scmp.eq.s32.totalorder %s41, 3
      %p148 = por %p146, %p147
      %p149 = scmp.ne.s32.totalorder %s138, %s139
      %p150 = scmp.eq.s32.totalorder %s41, 0
      %p151 = por %p149, %p150
      %p152 = scmp.ne.s32.totalorder %s138, %s139
      %p153 = scmp.eq.s32.totalorder %s42, 3
      %p154 = por %p152, %p153
      %p156 = scmp.ne.s32.totalorder %s139, %s155
      %p157 = scmp.eq.s32.totalorder %s42, 0
      %p158 = por %p156, %p157
      %s159 = ssub.s32 %s43, %s55
      %s160 = ssub.s32 %s44, %s51
      %s161 = sor.u32 %s159, %s160
      %p162 = scmp.eq.s32.totalorder %s161, 0
      %s164 = sadd.s32 %s163, 1
      %s165 = scalar_select %p162, %s163, %s164
      %p168 = pneg %p162
      %p169 = scmp.eq.s32.totalorder %s36, 3
      %p170 = por %p168, %p169
      %p171 = scmp.ne.s32.totalorder %s163, %s166
      %p172 = scmp.eq.s32.totalorder %s36, 0
      %p173 = por %p171, %p172
      %p174 = scmp.ne.s32.totalorder %s163, %s166
      %p175 = scmp.eq.s32.totalorder %s41, 3
      %p176 = por %p174, %p175
      %p177 = scmp.ne.s32.totalorder %s166, %s167
      %p178 = scmp.eq.s32.totalorder %s41, 0
      %p179 = por %p177, %p178
      %p180 = scmp.ne.s32.totalorder %s166, %s167
      %p181 = scmp.eq.s32.totalorder %s42, 3
      %p182 = por %p180, %p181
      %p184 = scmp.ne.s32.totalorder %s167, %s183
      %p185 = scmp.eq.s32.totalorder %s42, 0
      %p186 = por %p184, %p185
      %s187 = ssub.s32 %s43, %s55
      %s188 = ssub.s32 %s44, %s51
      %s189 = sor.u32 %s187, %s188
      %p190 = scmp.eq.s32.totalorder %s189, 0
      %s192 = sadd.s32 %s191, 1
      %s193 = scalar_select %p190, %s191, %s192
      %p196 = pneg %p190
      %p197 = scmp.eq.s32.totalorder %s36, 3
      %p198 = por %p196, %p197
      %p199 = scmp.ne.s32.totalorder %s191, %s194
      %p200 = scmp.eq.s32.totalorder %s36, 0
      %p201 = por %p199, %p200
      %p202 = scmp.ne.s32.totalorder %s191, %s194
      %p203 = scmp.eq.s32.totalorder %s41, 3
      %p204 = por %p202, %p203
      %p205 = scmp.ne.s32.totalorder %s194, %s195
      %p206 = scmp.eq.s32.totalorder %s41, 0
      %p207 = por %p205, %p206
      %p208 = scmp.ne.s32.totalorder %s194, %s195
      %p209 = scmp.eq.s32.totalorder %s42, 3
      %p210 = por %p208, %p209
      %p212 = scmp.ne.s32.totalorder %s195, %s211
      %p213 = scmp.eq.s32.totalorder %s42, 0
      %p214 = por %p212, %p213
      %s215 = ssub.s32 %s43, %s55
      %s216 = ssub.s32 %s44, %s51
      %s217 = sor.u32 %s215, %s216
      %p218 = scmp.eq.s32.totalorder %s217, 0
      %s220 = sadd.s32 %s219, 1
      %s221 = scalar_select %p218, %s219, %s220
      %p224 = pneg %p218
      %p225 = scmp.eq.s32.totalorder %s36, 3
      %p226 = por %p224, %p225
      %p227 = scmp.ne.s32.totalorder %s219, %s222
      %p228 = scmp.eq.s32.totalorder %s36, 0
      %p229 = por %p227, %p228
      %p230 = scmp.ne.s32.totalorder %s219, %s222
      %p231 = scmp.eq.s32.totalorder %s41, 3
      %p232 = por %p230, %p231
      %p233 = scmp.ne.s32.totalorder %s222, %s223
      %p234 = scmp.eq.s32.totalorder %s41, 0
      %p235 = por %p233, %p234
      %p236 = scmp.ne.s32.totalorder %s222, %s223
      %p237 = scmp.eq.s32.totalorder %s42, 3
      %p238 = por %p236, %p237
      %p240 = scmp.ne.s32.totalorder %s223, %s239
      %p241 = scmp.eq.s32.totalorder %s42, 0
      %p242 = por %p240, %p241
      %s243 = ssub.s32 %s43, %s55
      %s244 = ssub.s32 %s44, %s51
      %s245 = sor.u32 %s243, %s244
      %p246 = scmp.eq.s32.totalorder %s245, 0
      %s248 = sadd.s32 %s247, 1
      %s249 = scalar_select %p246, %s247, %s248
      %p252 = pneg %p246
      %p253 = scmp.eq.s32.totalorder %s36, 3
      %p254 = por %p252, %p253
      %p255 = scmp.ne.s32.totalorder %s247, %s250
      %p256 = scmp.eq.s32.totalorder %s36, 0
      %p257 = por %p255, %p256
      %p258 = scmp.ne.s32.totalorder %s247, %s250
      %p259 = scmp.eq.s32.totalorder %s41, 3
      %p260 = por %p258, %p259
      %p261 = scmp.ne.s32.totalorder %s250, %s251
      %p262 = scmp.eq.s32.totalorder %s41, 0
      %p263 = por %p261, %p262
      %p264 = scmp.ne.s32.totalorder %s250, %s251
      %p265 = scmp.eq.s32.totalorder %s42, 3
      %p266 = por %p264, %p265
      %p268 = scmp.ne.s32.totalorder %s251, %s267
      %p269 = scmp.eq.s32.totalorder %s42, 0
      %p270 = por %p268, %p269
      %s271 = ssub.s32 %s43, %s55
      %s272 = ssub.s32 %s44, %s51
      %s273 = sor.u32 %s271, %s272
      %p274 = scmp.eq.s32.totalorder %s273, 0
      %s276 = sadd.s32 %s275, 1
      %s277 = scalar_select %p274, %s275, %s276
      %p280 = pneg %p274
      %p281 = scmp.eq.s32.totalorder %s36, 3
      %p282 = por %p280, %p281
      %p283 = scmp.ne.s32.totalorder %s275, %s278
      %p284 = scmp.eq.s32.totalorder %s36, 0
      %p285 = por %p283, %p284
      %p286 = scmp.ne.s32.totalorder %s275, %s278
      %p287 = scmp.eq.s32.totalorder %s41, 3
      %p288 = por %p286, %p287
      %p289 = scmp.ne.s32.totalorder %s278, %s279
      %p290 = scmp.eq.s32.totalorder %s41, 0
      %p291 = por %p289, %p290
      %p292 = scmp.ne.s32.totalorder %s278, %s279
      %p293 = scmp.eq.s32.totalorder %s42, 3
      %p294 = por %p292, %p293
      %p296 = scmp.ne.s32.totalorder %s279, %s295
      %p297 = scmp.eq.s32.totalorder %s42, 0
      %p298 = por %p296, %p297
      %s299 = ssub.s32 %s43, %s55
      %s300 = ssub.s32 %s44, %s51
      %s301 = sor.u32 %s299, %s300
      %p302 = scmp.eq.s32.totalorder %s301, 0
      %s304 = sadd.s32 %s303, 1
      %s305 = scalar_select %p302, %s303, %s304
      %p308 = pneg %p302
      %p309 = scmp.eq.s32.totalorder %s36, 3
      %p310 = por %p308, %p309
      %p311 = scmp.ne.s32.totalorder %s303, %s306
      %p312 = scmp.eq.s32.totalorder %s36, 0
      %p313 = por %p311, %p312
      %p314 = scmp.ne.s32.totalorder %s303, %s306
      %p315 = scmp.eq.s32.totalorder %s41, 3
      %p316 = por %p314, %p315
      %p317 = scmp.ne.s32.totalorder %s306, %s307
      %p318 = scmp.eq.s32.totalorder %s41, 0
      %p319 = por %p317, %p318
      %p320 = scmp.ne.s32.totalorder %s306, %s307
      %p321 = scmp.eq.s32.totalorder %s42, 3
      %p322 = por %p320, %p321
      %p324 = scmp.ne.s32.totalorder %s307, %s323
      %p325 = scmp.eq.s32.totalorder %s42, 0
      %p326 = por %p324, %p325
      %s327 = ssub.s32 %s43, %s55
      %s328 = ssub.s32 %s44, %s51
      %s329 = sor.u32 %s327, %s328
      %p330 = scmp.eq.s32.totalorder %s329, 0
      %s332 = sadd.s32 %s331, 1
      %s333 = scalar_select %p330, %s331, %s332
      %p336 = pneg %p330
      %p337 = scmp.eq.s32.totalorder %s36, 3
      %p338 = por %p336, %p337
      %p339 = scmp.ne.s32.totalorder %s331, %s334
      %p340 = scmp.eq.s32.totalorder %s36, 0
      %p341 = por %p339, %p340
      %p342 = scmp.ne.s32.totalorder %s331, %s334
      %p343 = scmp.eq.s32.totalorder %s41, 3
      %p344 = por %p342, %p343
      %p345 = scmp.ne.s32.totalorder %s334, %s335
      %p346 = scmp.eq.s32.totalorder %s41, 0
      %p347 = por %p345, %p346
      %p348 = scmp.ne.s32.totalorder %s334, %s335
      %p349 = scmp.eq.s32.totalorder %s42, 3
      %p350 = por %p348, %p349
      %p352 = scmp.ne.s32.totalorder %s335, %s351
      %p353 = scmp.eq.s32.totalorder %s42, 0
      %p354 = por %p352, %p353
      %p355 = scmp.le.s32.totalorder 1, %s36
      %p356 = scmp.lt.s32.totalorder %s36, 5
      %p357 = pnand %p355, %p356
      %p358 = pneg %p357
      // Predicated region
      $region9: #{tpu_custom_call.1} parent=5 // pred_check
        _
      $region10: #{tpu_custom_call.1} parent=5 // pred_check_branch
        %360 = sbr.rel (%p357) target = $region12
      $region11: #{tpu_custom_call.1} parent=5 // pred_region
        %s361 = ssub.s32 %s36, 1
        // Predicated region
        $region13: #{tpu_custom_call.1} parent=11 // pred_check
          %p362 = pneg %p69
        $region14: #{tpu_custom_call.1} parent=11 // pred_check_branch
          %364 = sbr.rel (%p362) target = $region16
        $region15: #{tpu_custom_call.1} parent=11 // pred_region
          %s366 = ssub.s32 16, 16
          %367 = vsyncadd [#allocation5], %s366
          %370 = dma.hbm_to_smem %s0, 16, [#allocation2], [#allocation5]
        $region16: #{tpu_custom_call.1} parent=11 // pred_fallthru
          _
      $region12: #{tpu_custom_call.1} parent=5 // pred_fallthru
        _
      %p371 = scmp.lt.s32.totalorder %s36, 4
      // Predicated region
      $region17: #{tpu_custom_call.1} parent=5 // pred_check
        %p372 = pneg %p371
      $region18: #{tpu_custom_call.1} parent=5 // pred_check_branch
        %374 = sbr.rel (%p372) target = $region20
      $region19: #{tpu_custom_call.1} parent=5 // pred_region
        // Predicated region
        $region21: #{tpu_custom_call.1} parent=19 // pred_check
          %p375 = pneg %p89
        $region22: #{tpu_custom_call.1} parent=19 // pred_check_branch
          %377 = sbr.rel (%p375) target = $region24
        $region23: #{tpu_custom_call.1} parent=19 // pred_region
          %s378 = sand.u32 %s79, 1
          %s379 = scalar_lea.sflag [#allocation3], %s378
          %s380 = sand.u32 %s79, 1
          %s381 = smul.addr %s380, 4
          %s382 = scalar_lea.vmem [#allocation6], %s381
          %s384 = ssub.s32 64, 64
          %385 = vsyncadd %s379, %s384
          %s386 = smul.addr %s44, 64
          %s387 = scalar_lea.hbm %s1, %s386
          %s389 = sshll.u32 %s382, 4
          %s390 = int_to_ptr.vmem [resolvable:$true] %s389
          %392 = dma.hbm_to_vmem [thread:$0]  %s387, 64, %s390, %s379
        $region24: #{tpu_custom_call.1} parent=19 // pred_fallthru
          _
      $region20: #{tpu_custom_call.1} parent=5 // pred_fallthru
        _
      %p393 = scmp.le.s32.totalorder 1, %s36
      %p394 = scmp.lt.s32.totalorder %s36, 5
      %p395 = pnand %p393, %p394
      %p396 = pneg %p395
      // Predicated region
      $region25: #{tpu_custom_call.1} parent=5 // pred_check
        _
      $region26: #{tpu_custom_call.1} parent=5 // pred_check_branch
        %398 = sbr.rel (%p395) target = $region28
      $region27: #{tpu_custom_call.1} parent=5 // pred_region
        %s399 = ssub.s32 %s36, 1
        // Predicated region
        $region29: #{tpu_custom_call.1} parent=27 // pred_check
          %p400 = pneg %p69
        $region30: #{tpu_custom_call.1} parent=27 // pred_check_branch
          %402 = sbr.rel (%p400) target = $region32
        $region31: #{tpu_custom_call.1} parent=27 // pred_region
          %403 = dma.done [#allocation5], 16
        $region32: #{tpu_custom_call.1} parent=27 // pred_fallthru
          _
        %s404 = sand.u32 %s82, 1
        %s405 = scalar_lea.sflag [#allocation3], %s404
        %s406 = sand.u32 %s82, 1
        %s407 = smul.addr %s406, 4
        %s408 = scalar_lea.vmem [#allocation6], %s407
        // Predicated region
        $region33: #{tpu_custom_call.1} parent=27 // pred_check
          %p409 = pneg %p95
        $region34: #{tpu_custom_call.1} parent=27 // pred_check_branch
          %411 = sbr.rel (%p409) target = $region36
        $region35: #{tpu_custom_call.1} parent=27 // pred_region
          %412 = dma.done %s405, 64
        $region36: #{tpu_custom_call.1} parent=27 // pred_fallthru
          _
        %413 = sfence
        %p414 = pneg %p69
        %p415 = pneg %p66
        %s416 = sand.u32 %s82, 1
        %s417 = scalar_lea.sflag [#allocation3], %s416
        %s418 = sand.u32 %s82, 1
        %s419 = smul.addr %s418, 4
        %s420 = scalar_lea.vmem [#allocation6], %s419
        %p421 = pneg %p95
        %p422 = pneg %p92
        %p423 = pneg %p123
        %p424 = pneg %p120
        %s425 = sand.u32 %s110, 1
        %s426 = scalar_lea.sflag [#allocation4], %s425
        %s427 = sand.u32 %s110, 1
        %s428 = smul.addr %s427, 4
        %s429 = scalar_lea.vmem [#allocation7], %s428
        %p430 = pneg %p151
        %p431 = pneg %p148
        %s432 = sand.u32 %s41, 1
        %s433 = scalar_lea.sflag [#allocation9], %s432
        %s434 = sand.u32 %s138, 1
        %s435 = smul.addr %s434, 4
        %s436 = scalar_lea.vmem [#allocation8], %s435
        %p437 = pneg %p179
        %p438 = pneg %p176
        %s439 = sand.u32 %s41, 1
        %s440 = scalar_lea.sflag [#allocation9], %s439
        %s441 = sand.u32 %s166, 1
        %s442 = smul.addr %s441, 4
        %s443 = scalar_lea.vmem [#allocation10], %s442
        %p444 = pneg %p207
        %p445 = pneg %p204
        %s446 = sand.u32 %s41, 1
        %s447 = scalar_lea.sflag [#allocation12], %s446
        %s448 = sand.u32 %s194, 1
        %s449 = smul.addr %s448, 4
        %s450 = scalar_lea.vmem [#allocation11], %s449
        %p451 = pneg %p235
        %p452 = pneg %p232
        %s453 = sand.u32 %s41, 1
        %s454 = scalar_lea.sflag [#allocation12], %s453
        %s455 = sand.u32 %s222, 1
        %s456 = smul.addr %s455, 4
        %s457 = scalar_lea.vmem [#allocation13], %s456
        %p458 = pneg %p263
        %p459 = pneg %p260
        %s460 = sand.u32 %s41, 1
        %s461 = scalar_lea.sflag [#allocation15], %s460
        %s462 = sand.u32 %s250, 1
        %s463 = smul.addr %s462, 4
        %s464 = scalar_lea.vmem [#allocation14], %s463
        %p465 = pneg %p291
        %p466 = pneg %p288
        %s467 = sand.u32 %s41, 1
        %s468 = scalar_lea.sflag [#allocation15], %s467
        %s469 = sand.u32 %s278, 1
        %s470 = smul.addr %s469, 4
        %s471 = scalar_lea.vmem [#allocation16], %s470
        %p472 = pneg %p319
        %p473 = pneg %p316
        %s474 = sand.u32 %s41, 1
        %s475 = scalar_lea.sflag [#allocation18], %s474
        %s476 = sand.u32 %s306, 1
        %s477 = smul.addr %s476, 4
        %s478 = scalar_lea.vmem [#allocation17], %s477
        %p479 = pneg %p347
        %p480 = pneg %p344
        %s481 = sand.u32 %s41, 1
        %s482 = scalar_lea.sflag [#allocation18], %s481
        %s483 = sand.u32 %s334, 1
        %s484 = smul.addr %s483, 4
        %s485 = scalar_lea.vmem [#allocation19], %s484
        %s486 = smul.u32 %s45, 2
        %s487 = sadd.s32 %s486, %s46
        %s488 = smul.u32 %s487, 12
        %s489 = sld [smem:[#allocation2 + %s488]]
        %s490 = sadd.s32 %s488, 1
        %s491 = sld [smem:[#allocation2 + %s490]]
        %s492 = sadd.s32 %s488, 2
        %s493 = sld [smem:[#allocation2 + %s492]]
        %s494 = sadd.s32 %s488, 3
        %s495 = sld [smem:[#allocation2 + %s494]]
        %s496 = sadd.s32 %s488, 4
        %s497 = sld [smem:[#allocation2 + %s496]]
        %s498 = sadd.s32 %s488, 5
        %s499 = sld [smem:[#allocation2 + %s498]]
        %s500 = sadd.s32 %s488, 6
        %s501 = sld [smem:[#allocation2 + %s500]]
        %s502 = sadd.s32 %s488, 7
        %s503 = sld [smem:[#allocation2 + %s502]]
        %s504 = sadd.s32 %s488, 8
        %s505 = sld [smem:[#allocation2 + %s504]]
        %s506 = sadd.s32 %s488, 9
        %s507 = sld [smem:[#allocation2 + %s506]]
        %s508 = sadd.s32 %s488, 10
        %s509 = sld [smem:[#allocation2 + %s508]]
        %s510 = sadd.s32 %s488, 11
        %s511 = sld [smem:[#allocation2 + %s510]]
        %v512 = vlaneseq
        %v513 = vand.u32 %v512, 127
        %v514 = vcvt.s32.f32 %v513
        %v515 = vlaneseq
        %v516 = vshrl.u32 %v515, 7
        %v517 = vcvt.s32.f32 %v516
        %v518 = vld [vmem:[%s408] sm:$0xf]
        %v519 = vstv %s489
        %v520 = vmul.f32 %v519, %v514
        %v521 = vstv %s491
        %v522 = vmul.f32 %v521, %v517
        %v523 = vadd.f32 %v520, %v522
        %v524 = vstv %s493
        %v525 = vadd.f32 %v523, %v524
        %v526 = vstv %s497
        %v527 = vmul.f32 %v526, %v514
        %v528 = vstv %s499
        %v529 = vmul.f32 %v528, %v517
        %v530 = vadd.f32 %v527, %v529
        %v531 = vstv %s501
        %v532 = vadd.f32 %v530, %v531
        %v533 = vstv %s505
        %v534 = vmul.f32 %v533, %v514
        %v535 = vstv %s507
        %v536 = vmul.f32 %v535, %v517
        %v537 = vadd.f32 %v534, %v536
        %v538 = vstv %s509
        %v539 = vadd.f32 %v537, %v538
        %v540 = vmul.f32 %v525, %v518
        %v541 = vstv %s495
        %v542 = vadd.f32 %v540, %v541
        %v543 = vmul.f32 %v532, %v518
        %v544 = vstv %s503
        %v545 = vadd.f32 %v543, %v544
        %v546 = vmul.f32 %v539, %v518
        %v547 = vstv %s511
        %v548 = vadd.f32 %v546, %v547
        %v549 = vadd.f32 %v548, 1e-10
        %v550 = vrcp.pop %v549
        %v551 = vmul.f32 %v542, %v550
        %v552 = vmul.f32 %v545, %v550
        %v553 = vfloor.f32 %v551
        %v554 = vfloor.f32 %v552
        %vm555 = vcmp.ge.f32.partialorder %v553, 0.0
        %v556 = vadd.f32 %v553, 1.0
        %vm557 = vcmp.le.f32.partialorder %v556, 3.0
        %vm558 = vmand %vm555, %vm557
        %vm559 = vcmp.ge.f32.partialorder %v554, 0.0
        %vm560 = vmand %vm558, %vm559
        %v561 = vadd.f32 %v554, 1.0
        %vm562 = vcmp.le.f32.partialorder %v561, 3.0
        %vm563 = vmand %vm560, %vm562
        %v564 = vsel %vm563, 1, 0
        %v565 = vcvt.s32.f32 %v564
        %vm566 = vcmask 27648
        %567 = vst.msk [vmem:[%s429] sm:$0xf] %vm566, %v565
        %v568 = vmax.f32 %v553, 0.0
        %v569 = vmin.f32 %v568, 3.0
        %v570 = vmax.f32 %v556, 0.0
        %v571 = vmin.f32 %v570, 3.0
        %v572 = vmax.f32 %v554, 0.0
        %v573 = vmin.f32 %v572, 3.0
        %v574 = vmax.f32 %v561, 0.0
        %v575 = vmin.f32 %v574, 3.0
        %v576 = vsub.f32 %v571, %v551
        %v577 = vsub.f32 %v551, %v569
        %v578 = vsub.f32 %v575, %v552
        %v579 = vsub.f32 %v552, %v573
        %v580 = vmul.f32 %v576, %v578
        %581 = vst.msk [vmem:[%s436] sm:$0xf] %vm566, %v580
        %v582 = vmul.f32 %v576, %v579
        %583 = vst.msk [vmem:[%s443] sm:$0xf] %vm566, %v582
        %v584 = vmul.f32 %v577, %v578
        %585 = vst.msk [vmem:[%s450] sm:$0xf] %vm566, %v584
        %v586 = vmul.f32 %v577, %v579
        %587 = vst.msk [vmem:[%s457] sm:$0xf] %vm566, %v586
        %v588 = vcvt.f32.s32.to.zero.pseudo %v569
        %v589 = vcvt.f32.s32.to.zero.pseudo %v571
        %v590 = vcvt.f32.s32.to.zero.pseudo %v573
        %v591 = vcvt.f32.s32.to.zero.pseudo %v575
        %v592 = vmul.u32 %v590, 4
        %v593 = vadd.s32 %v592, %v588
        %594 = vst.msk [vmem:[%s464] sm:$0xf] %vm566, %v593
        %v595 = vmul.u32 %v591, 4
        %v596 = vadd.s32 %v595, %v588
        %597 = vst.msk [vmem:[%s471] sm:$0xf] %vm566, %v596
        %v598 = vadd.s32 %v592, %v589
        %599 = vst.msk [vmem:[%s478] sm:$0xf] %vm566, %v598
        %v600 = vadd.s32 %v595, %v589
        %601 = vst.msk [vmem:[%s485] sm:$0xf] %vm566, %v600
        %s602 = sand.u32 %s110, 1
        %s603 = scalar_lea.sflag [#allocation4], %s602
        %s604 = sand.u32 %s110, 1
        %s605 = smul.addr %s604, 4
        %s606 = scalar_lea.vmem [#allocation7], %s605
        %s607 = sand.u32 %s41, 1
        %s608 = scalar_lea.sflag [#allocation9], %s607
        %s609 = sand.u32 %s138, 1
        %s610 = smul.addr %s609, 4
        %s611 = scalar_lea.vmem [#allocation8], %s610
        %s612 = sand.u32 %s41, 1
        %s613 = scalar_lea.sflag [#allocation9], %s612
        %s614 = sand.u32 %s166, 1
        %s615 = smul.addr %s614, 4
        %s616 = scalar_lea.vmem [#allocation10], %s615
        %s617 = sand.u32 %s41, 1
        %s618 = scalar_lea.sflag [#allocation12], %s617
        %s619 = sand.u32 %s194, 1
        %s620 = smul.addr %s619, 4
        %s621 = scalar_lea.vmem [#allocation11], %s620
        %s622 = sand.u32 %s41, 1
        %s623 = scalar_lea.sflag [#allocation12], %s622
        %s624 = sand.u32 %s222, 1
        %s625 = smul.addr %s624, 4
        %s626 = scalar_lea.vmem [#allocation13], %s625
        %s627 = sand.u32 %s41, 1
        %s628 = scalar_lea.sflag [#allocation15], %s627
        %s629 = sand.u32 %s250, 1
        %s630 = smul.addr %s629, 4
        %s631 = scalar_lea.vmem [#allocation14], %s630
        %s632 = sand.u32 %s41, 1
        %s633 = scalar_lea.sflag [#allocation15], %s632
        %s634 = sand.u32 %s278, 1
        %s635 = smul.addr %s634, 4
        %s636 = scalar_lea.vmem [#allocation16], %s635
        %s637 = sand.u32 %s41, 1
        %s638 = scalar_lea.sflag [#allocation18], %s637
        %s639 = sand.u32 %s306, 1
        %s640 = smul.addr %s639, 4
        %s641 = scalar_lea.vmem [#allocation17], %s640
        %s642 = sand.u32 %s41, 1
        %s643 = scalar_lea.sflag [#allocation18], %s642
        %s644 = sand.u32 %s334, 1
        %s645 = smul.addr %s644, 4
        %s646 = scalar_lea.vmem [#allocation19], %s645
        // Predicated region
        $region37: #{tpu_custom_call.1} parent=27 // pred_check
          %p647 = pneg %p120
        $region38: #{tpu_custom_call.1} parent=27 // pred_check_branch
          %649 = sbr.rel (%p647) target = $region40
        $region39: #{tpu_custom_call.1} parent=27 // pred_region
          %s651 = ssub.s32 64, 64
          %652 = vsyncadd %s603, %s651
          %s653 = smul.addr %s45, 2
          %s654 = sadd.s32 %s46, %s653
          %s655 = smul.addr %s654, 64
          %s656 = scalar_lea.hbm %s2, %s655
          %s658 = sshll.u32 %s606, 4
          %s659 = int_to_ptr.vmem [resolvable:$true] %s658
          %661 = dma.vmem_to_hbm [thread:$0]  %s659, 64, %s656, %s603
        $region40: #{tpu_custom_call.1} parent=27 // pred_fallthru
          _
        // Predicated region
        $region41: #{tpu_custom_call.1} parent=27 // pred_check
          %p662 = pneg %p148
        $region42: #{tpu_custom_call.1} parent=27 // pred_check_branch
          %664 = sbr.rel (%p662) target = $region44
        $region43: #{tpu_custom_call.1} parent=27 // pred_region
          %s666 = ssub.s32 64, 64
          %667 = vsyncadd %s608, %s666
          %s668 = smul.addr %s45, 2
          %s669 = sadd.s32 %s46, %s668
          %s670 = smul.addr %s669, 64
          %s671 = scalar_lea.hbm %s3, %s670
          %s673 = sshll.u32 %s611, 4
          %s674 = int_to_ptr.vmem [resolvable:$true] %s673
          %676 = dma.vmem_to_hbm [thread:$0]  %s674, 64, %s671, %s608
        $region44: #{tpu_custom_call.1} parent=27 // pred_fallthru
          _
        // Predicated region
        $region45: #{tpu_custom_call.1} parent=27 // pred_check
          %p677 = pneg %p176
        $region46: #{tpu_custom_call.1} parent=27 // pred_check_branch
          %679 = sbr.rel (%p677) target = $region48
        $region47: #{tpu_custom_call.1} parent=27 // pred_region
          %s681 = ssub.s32 64, 64
          %682 = vsyncadd %s613, %s681
          %s683 = smul.addr %s45, 2
          %s684 = sadd.s32 %s46, %s683
          %s685 = smul.addr %s684, 64
          %s686 = scalar_lea.hbm %s4, %s685
          %s688 = sshll.u32 %s616, 4
          %s689 = int_to_ptr.vmem [resolvable:$true] %s688
          %691 = dma.vmem_to_hbm [thread:$0]  %s689, 64, %s686, %s613
        $region48: #{tpu_custom_call.1} parent=27 // pred_fallthru
          _
        // Predicated region
        $region49: #{tpu_custom_call.1} parent=27 // pred_check
          %p692 = pneg %p204
        $region50: #{tpu_custom_call.1} parent=27 // pred_check_branch
          %694 = sbr.rel (%p692) target = $region52
        $region51: #{tpu_custom_call.1} parent=27 // pred_region
          %s696 = ssub.s32 64, 64
          %697 = vsyncadd %s618, %s696
          %s698 = smul.addr %s45, 2
          %s699 = sadd.s32 %s46, %s698
          %s700 = smul.addr %s699, 64
          %s701 = scalar_lea.hbm %s5, %s700
          %s703 = sshll.u32 %s621, 4
          %s704 = int_to_ptr.vmem [resolvable:$true] %s703
          %706 = dma.vmem_to_hbm [thread:$0]  %s704, 64, %s701, %s618
        $region52: #{tpu_custom_call.1} parent=27 // pred_fallthru
          _
        // Predicated region
        $region53: #{tpu_custom_call.1} parent=27 // pred_check
          %p707 = pneg %p232
        $region54: #{tpu_custom_call.1} parent=27 // pred_check_branch
          %709 = sbr.rel (%p707) target = $region56
        $region55: #{tpu_custom_call.1} parent=27 // pred_region
          %s711 = ssub.s32 64, 64
          %712 = vsyncadd %s623, %s711
          %s713 = smul.addr %s45, 2
          %s714 = sadd.s32 %s46, %s713
          %s715 = smul.addr %s714, 64
          %s716 = scalar_lea.hbm %s6, %s715
          %s718 = sshll.u32 %s626, 4
          %s719 = int_to_ptr.vmem [resolvable:$true] %s718
          %721 = dma.vmem_to_hbm [thread:$0]  %s719, 64, %s716, %s623
        $region56: #{tpu_custom_call.1} parent=27 // pred_fallthru
          _
        // Predicated region
        $region57: #{tpu_custom_call.1} parent=27 // pred_check
          %p722 = pneg %p260
        $region58: #{tpu_custom_call.1} parent=27 // pred_check_branch
          %724 = sbr.rel (%p722) target = $region60
        $region59: #{tpu_custom_call.1} parent=27 // pred_region
          %s726 = ssub.s32 64, 64
          %727 = vsyncadd %s628, %s726
          %s728 = smul.addr %s45, 2
          %s729 = sadd.s32 %s46, %s728
          %s730 = smul.addr %s729, 64
          %s731 = scalar_lea.hbm %s7, %s730
          %s733 = sshll.u32 %s631, 4
          %s734 = int_to_ptr.vmem [resolvable:$true] %s733
          %736 = dma.vmem_to_hbm [thread:$0]  %s734, 64, %s731, %s628
        $region60: #{tpu_custom_call.1} parent=27 // pred_fallthru
          _
        // Predicated region
        $region61: #{tpu_custom_call.1} parent=27 // pred_check
          %p737 = pneg %p288
        $region62: #{tpu_custom_call.1} parent=27 // pred_check_branch
          %739 = sbr.rel (%p737) target = $region64
        $region63: #{tpu_custom_call.1} parent=27 // pred_region
          %s741 = ssub.s32 64, 64
          %742 = vsyncadd %s633, %s741
          %s743 = smul.addr %s45, 2
          %s744 = sadd.s32 %s46, %s743
          %s745 = smul.addr %s744, 64
          %s746 = scalar_lea.hbm %s8, %s745
          %s748 = sshll.u32 %s636, 4
          %s749 = int_to_ptr.vmem [resolvable:$true] %s748
          %751 = dma.vmem_to_hbm [thread:$0]  %s749, 64, %s746, %s633
        $region64: #{tpu_custom_call.1} parent=27 // pred_fallthru
          _
        // Predicated region
        $region65: #{tpu_custom_call.1} parent=27 // pred_check
          %p752 = pneg %p316
        $region66: #{tpu_custom_call.1} parent=27 // pred_check_branch
          %754 = sbr.rel (%p752) target = $region68
        $region67: #{tpu_custom_call.1} parent=27 // pred_region
          %s756 = ssub.s32 64, 64
          %757 = vsyncadd %s638, %s756
          %s758 = smul.addr %s45, 2
          %s759 = sadd.s32 %s46, %s758
          %s760 = smul.addr %s759, 64
          %s761 = scalar_lea.hbm %s9, %s760
          %s763 = sshll.u32 %s641, 4
          %s764 = int_to_ptr.vmem [resolvable:$true] %s763
          %766 = dma.vmem_to_hbm [thread:$0]  %s764, 64, %s761, %s638
        $region68: #{tpu_custom_call.1} parent=27 // pred_fallthru
          _
        // Predicated region
        $region69: #{tpu_custom_call.1} parent=27 // pred_check
          %p767 = pneg %p344
        $region70: #{tpu_custom_call.1} parent=27 // pred_check_branch
          %769 = sbr.rel (%p767) target = $region72
        $region71: #{tpu_custom_call.1} parent=27 // pred_region
          %s771 = ssub.s32 64, 64
          %772 = vsyncadd %s643, %s771
          %s773 = smul.addr %s45, 2
          %s774 = sadd.s32 %s46, %s773
          %s775 = smul.addr %s774, 64
          %s776 = scalar_lea.hbm %s10, %s775
          %s778 = sshll.u32 %s646, 4
          %s779 = int_to_ptr.vmem [resolvable:$true] %s778
          %781 = dma.vmem_to_hbm [thread:$0]  %s779, 64, %s776, %s643
        $region72: #{tpu_custom_call.1} parent=27 // pred_fallthru
          _
      $region28: #{tpu_custom_call.1} parent=5 // pred_fallthru
        _
      %p782 = scmp.le.s32.totalorder 2, %s36
      // Predicated region
      $region73: #{tpu_custom_call.1} parent=5 // pred_check
        %p783 = pneg %p782
      $region74: #{tpu_custom_call.1} parent=5 // pred_check_branch
        %785 = sbr.rel (%p783) target = $region76
      $region75: #{tpu_custom_call.1} parent=5 // pred_region
        %s786 = ssub.s32 %s36, 2
        // Predicated region
        $region77: #{tpu_custom_call.1} parent=75 // pred_check
          %p787 = pneg %p126
        $region78: #{tpu_custom_call.1} parent=75 // pred_check_branch
          %789 = sbr.rel (%p787) target = $region80
        $region79: #{tpu_custom_call.1} parent=75 // pred_region
          %s790 = sand.u32 %s111, 1
          %s791 = scalar_lea.sflag [#allocation4], %s790
          %s792 = sand.u32 %s111, 1
          %s793 = smul.addr %s792, 4
          %s794 = scalar_lea.vmem [#allocation7], %s793
          %795 = dma.done %s791, 64
        $region80: #{tpu_custom_call.1} parent=75 // pred_fallthru
          _
        // Predicated region
        $region81: #{tpu_custom_call.1} parent=75 // pred_check
          %p796 = pneg %p154
        $region82: #{tpu_custom_call.1} parent=75 // pred_check_branch
          %798 = sbr.rel (%p796) target = $region84
        $region83: #{tpu_custom_call.1} parent=75 // pred_region
          %s799 = sand.u32 %s42, 1
          %s800 = scalar_lea.sflag [#allocation9], %s799
          %s801 = sand.u32 %s139, 1
          %s802 = smul.addr %s801, 4
          %s803 = scalar_lea.vmem [#allocation8], %s802
          %804 = dma.done %s800, 64
        $region84: #{tpu_custom_call.1} parent=75 // pred_fallthru
          _
        // Predicated region
        $region85: #{tpu_custom_call.1} parent=75 // pred_check
          %p805 = pneg %p182
        $region86: #{tpu_custom_call.1} parent=75 // pred_check_branch
          %807 = sbr.rel (%p805) target = $region88
        $region87: #{tpu_custom_call.1} parent=75 // pred_region
          %s808 = sand.u32 %s42, 1
          %s809 = scalar_lea.sflag [#allocation9], %s808
          %s810 = sand.u32 %s167, 1
          %s811 = smul.addr %s810, 4
          %s812 = scalar_lea.vmem [#allocation10], %s811
          %813 = dma.done %s809, 64
        $region88: #{tpu_custom_call.1} parent=75 // pred_fallthru
          _
        // Predicated region
        $region89: #{tpu_custom_call.1} parent=75 // pred_check
          %p814 = pneg %p210
        $region90: #{tpu_custom_call.1} parent=75 // pred_check_branch
          %816 = sbr.rel (%p814) target = $region92
        $region91: #{tpu_custom_call.1} parent=75 // pred_region
          %s817 = sand.u32 %s42, 1
          %s818 = scalar_lea.sflag [#allocation12], %s817
          %s819 = sand.u32 %s195, 1
          %s820 = smul.addr %s819, 4
          %s821 = scalar_lea.vmem [#allocation11], %s820
          %822 = dma.done %s818, 64
        $region92: #{tpu_custom_call.1} parent=75 // pred_fallthru
          _
        // Predicated region
        $region93: #{tpu_custom_call.1} parent=75 // pred_check
          %p823 = pneg %p238
        $region94: #{tpu_custom_call.1} parent=75 // pred_check_branch
          %825 = sbr.rel (%p823) target = $region96
        $region95: #{tpu_custom_call.1} parent=75 // pred_region
          %s826 = sand.u32 %s42, 1
          %s827 = scalar_lea.sflag [#allocation12], %s826
          %s828 = sand.u32 %s223, 1
          %s829 = smul.addr %s828, 4
          %s830 = scalar_lea.vmem [#allocation13], %s829
          %831 = dma.done %s827, 64
        $region96: #{tpu_custom_call.1} parent=75 // pred_fallthru
          _
        // Predicated region
        $region97: #{tpu_custom_call.1} parent=75 // pred_check
          %p832 = pneg %p266
        $region98: #{tpu_custom_call.1} parent=75 // pred_check_branch
          %834 = sbr.rel (%p832) target = $region100
        $region99: #{tpu_custom_call.1} parent=75 // pred_region
          %s835 = sand.u32 %s42, 1
          %s836 = scalar_lea.sflag [#allocation15], %s835
          %s837 = sand.u32 %s251, 1
          %s838 = smul.addr %s837, 4
          %s839 = scalar_lea.vmem [#allocation14], %s838
          %840 = dma.done %s836, 64
        $region100: #{tpu_custom_call.1} parent=75 // pred_fallthru
          _
        // Predicated region
        $region101: #{tpu_custom_call.1} parent=75 // pred_check
          %p841 = pneg %p294
        $region102: #{tpu_custom_call.1} parent=75 // pred_check_branch
          %843 = sbr.rel (%p841) target = $region104
        $region103: #{tpu_custom_call.1} parent=75 // pred_region
          %s844 = sand.u32 %s42, 1
          %s845 = scalar_lea.sflag [#allocation15], %s844
          %s846 = sand.u32 %s279, 1
          %s847 = smul.addr %s846, 4
          %s848 = scalar_lea.vmem [#allocation16], %s847
          %849 = dma.done %s845, 64
        $region104: #{tpu_custom_call.1} parent=75 // pred_fallthru
          _
        // Predicated region
        $region105: #{tpu_custom_call.1} parent=75 // pred_check
          %p850 = pneg %p322
        $region106: #{tpu_custom_call.1} parent=75 // pred_check_branch
          %852 = sbr.rel (%p850) target = $region108
        $region107: #{tpu_custom_call.1} parent=75 // pred_region
          %s853 = sand.u32 %s42, 1
          %s854 = scalar_lea.sflag [#allocation18], %s853
          %s855 = sand.u32 %s307, 1
          %s856 = smul.addr %s855, 4
          %s857 = scalar_lea.vmem [#allocation17], %s856
          %858 = dma.done %s854, 64
        $region108: #{tpu_custom_call.1} parent=75 // pred_fallthru
          _
        // Predicated region
        $region109: #{tpu_custom_call.1} parent=75 // pred_check
          %p859 = pneg %p350
        $region110: #{tpu_custom_call.1} parent=75 // pred_check_branch
          %861 = sbr.rel (%p859) target = $region112
        $region111: #{tpu_custom_call.1} parent=75 // pred_region
          %s862 = sand.u32 %s42, 1
          %s863 = scalar_lea.sflag [#allocation18], %s862
          %s864 = sand.u32 %s335, 1
          %s865 = smul.addr %s864, 4
          %s866 = scalar_lea.vmem [#allocation19], %s865
          %867 = dma.done %s863, 64
        $region112: #{tpu_custom_call.1} parent=75 // pred_fallthru
          _
      $region76: #{tpu_custom_call.1} parent=5 // pred_fallthru
        _
    $region6: #{tpu_custom_call.1} parent=1 // loop_footer
      %s40 = sadd.s32 1, %s36
    $region7: #{tpu_custom_call.1} parent=1 // loop_footer_branch
      %35 = sbr.rel target = $region3
    $region8: #{tpu_custom_call.1} parent=1 // loop_exit
      _
    %868 = vsyncpa [#allocation3], 1
    %s869 = scalar_lea.sflag [#allocation3], 1
    %870 = vsyncpa %s869, 1
    %871 = vsyncpa [#allocation4], 1
    %s872 = scalar_lea.sflag [#allocation4], 1
    %873 = vsyncpa %s872, 1
    %874 = vsyncpa [#allocation9], 1
    %s875 = scalar_lea.sflag [#allocation9], 1
    %876 = vsyncpa %s875, 1
    %877 = vsyncpa [#allocation12], 1
    %s878 = scalar_lea.sflag [#allocation12], 1
    %879 = vsyncpa %s878, 1
    %880 = vsyncpa [#allocation15], 1
    %s881 = scalar_lea.sflag [#allocation15], 1
    %882 = vsyncpa %s881, 1
    %883 = vsyncpa [#allocation18], 1
    %s884 = scalar_lea.sflag [#allocation18], 1
    %885 = vsyncpa %s884, 1
    %886 = vsyncpa [#allocation5], 1
    %s887 = scalar_lea.sflag [#allocation5], 1
    %888 = vsyncpa %s887, 1

</llo_original>
